<compile_context>
chip_gen: v6e
topology: v6e:2x2x1
jax: 0.10.0
libtpu: 0.0.40
codegen_flags: <defaults>
</compile_context>

<pallas_src>
import functools

import jax
import jax.numpy as jnp
import numpy as np
from jax.experimental import pallas as pl
from jax.experimental.pallas import tpu as pltpu


def cbam_kernel(x_ref, w1_ref, b1_ref, w2t_ref, b2_ref,
                wc1_ref, beff_ref, wc2k_ref, bc2_ref, mask_ref,
                o_ref, *, H, W):
    x = x_ref[...].astype(jnp.float32)                   # (Nb, C, HW)
    Nb, C, HW = x.shape
    Cr = w1_ref.shape[0]
    Cs = wc1_ref.shape[0]

    # ---------------- Channel gate ----------------
    # Global average pool over the spatial (lane) axis.
    pooled = jnp.mean(x, axis=2, keepdims=True)          # (Nb, C, 1)

    # Tiny MLP C -> Cr -> C on the VPU in the native (C on sublanes) layout.
    raw = b2_ref[...][None]                              # (1, C, 1) bias
    for r in range(Cr):
        h_r = jnp.sum(pooled * w1_ref[r][None], axis=1, keepdims=True)   # (Nb,1,1)
        h_r = jnp.maximum(h_r + b1_ref[r], 0.0)
        raw = raw + h_r * w2t_ref[r][None]               # (Nb, C, 1)

    # Softmax over channels (sublane axis) -- exact reciprocal (cheap here).
    m = jnp.max(raw, axis=1, keepdims=True)              # (Nb, 1, 1)
    e = jnp.exp(raw - m)
    att = e / jnp.sum(e, axis=1, keepdims=True)          # (Nb, C, 1)
    xc = x * att                                         # (Nb, C, HW)

    # ---------------- Spatial gate ----------------
    # 1x1 conv C -> Cs (+ folded BatchNorm + ReLU) as ONE batched MXU
    # contraction over the channel (sublane) axis.  Canonical batched form
    # (batch, m, k) x (batch, k, n); weights broadcast once along batch.
    wc1b = jnp.broadcast_to(wc1_ref[...][None], (Nb, Cs, C))
    y = jnp.einsum('nsc,ncp->nsp', wc1b, xc,
                   preferred_element_type=jnp.float32)   # (Nb, Cs, HW)
    y = jnp.maximum(y + beff_ref[...][None], 0.0)        # + folded biases, ReLU

    # 3x3 SAME conv on the flat (.., 1, HW) layout: combine the Cs channels
    # per tap first, then ONE lane-roll per tap and the zero-padding mask
    # applied AFTER the roll.  Center tap (k=4) needs neither roll nor mask.
    def tap(k):
        wk = wc2k_ref[k][None]                           # (1, Cs, 1)
        return jnp.sum(y * wk, axis=1, keepdims=True)    # (Nb, 1, HW)

    acc = tap(4) + bc2_ref[0]                            # center tap + bias
    for dy in (-1, 0, 1):
        for dx in (-1, 0, 1):
            if dy == 0 and dx == 0:
                continue
            k = (dy + 1) * 3 + (dx + 1)
            shift = (-(dy * W + dx)) % HW                # out[p] sees y[p + off]
            zk = tap(k)
            if shift:
                zk = pltpu.roll(zk, shift, axis=2)
            acc = acc + zk * mask_ref[k]                 # mask AFTER the roll
    s_att = jax.nn.sigmoid(acc)                          # (Nb, 1, HW)

    o_ref[...] = (xc * s_att).astype(o_ref.dtype)


def cbam_pallas(x, p, eps=1e-5, block_n=64):
    N, C, H, W = x.shape
    HW = H * W
    Cr = p['w1'].shape[0]
    Cs = p['wc1'].shape[0]

    xf = x.reshape(N, C, HW).astype(jnp.float32)

    # Fold BatchNorm (running stats, eval mode) + 1x1-conv bias on the host.
    bns = p['gamma'] / jnp.sqrt(p['var'] + eps)                    # (Cs,)
    beff = (p['bc1'] * bns + (p['beta'] - p['mean'] * bns)).astype(jnp.float32)

    w1 = p['w1'].reshape(Cr, C, 1).astype(jnp.float32)             # (Cr, C, 1)
    b1 = p['b1'].astype(jnp.float32)                               # (Cr,)  SMEM
    w2t = p['w2'].T.reshape(Cr, C, 1).astype(jnp.float32)          # (Cr, C, 1)
    b2 = p['b2'].reshape(C, 1).astype(jnp.float32)                 # (C, 1)
    wc1e = (p['wc1'] * bns[:, None]).astype(jnp.float32)           # (Cs, C)  MXU lhs
    beffc = beff.reshape(Cs, 1)                                    # (Cs, 1)
    wc2k = jnp.transpose(p['wc2'].reshape(Cs, 9)).reshape(9, Cs, 1).astype(jnp.float32)
    bc2 = p['bc2'].reshape(1).astype(jnp.float32)                  # (1,)   SMEM

    # Host-precomputed zero-padding validity masks for the 9 conv taps.
    ii = np.arange(H)[:, None]
    jj = np.arange(W)[None, :]
    masks = []
    for dy in (-1, 0, 1):
        for dx in (-1, 0, 1):
            valid = ((ii + dy >= 0) & (ii + dy < H) &
                     (jj + dx >= 0) & (jj + dx < W))
            masks.append(valid.reshape(-1))
    tapmask = jnp.asarray(np.stack(masks, 0), jnp.float32).reshape(9, 1, HW)

    # Batch tile selection: cdiv grid + zero-padded batch.  Ensure >=2 grid
    # steps when N >= 2 (v7x dual TensorCore) and cap nb by a VMEM budget for
    # the double-buffered in+out slabs.
    bytes_per_sample = C * HW * 4
    vmem_budget = 12 * 1024 * 1024
    nb_vmem = max(1, vmem_budget // (4 * bytes_per_sample))
    nb = min(block_n, nb_vmem)
    if N >= 2:
        nb = min(nb, pl.cdiv(N, 2))
    nb = max(1, nb)
    grid_n = pl.cdiv(N, nb)
    Np = grid_n * nb
    if Np != N:
        xf = jnp.pad(xf, ((0, Np - N), (0, 0), (0, 0)))

    def vmem_full(a):
        nd = a.ndim
        return pl.BlockSpec(a.shape, lambda n, nd=nd: (0,) * nd)

    smem = pl.BlockSpec(memory_space=pltpu.MemorySpace.SMEM)

    out = pl.pallas_call(
        functools.partial(cbam_kernel, H=H, W=W),
        out_shape=jax.ShapeDtypeStruct((Np, C, HW), jnp.float32),
        grid=(grid_n,),
        in_specs=[
            pl.BlockSpec((nb, C, HW), lambda n: (n, 0, 0)),   # x slab
            vmem_full(w1), smem,                              # w1, b1
            vmem_full(w2t), vmem_full(b2),                    # w2t, b2
            vmem_full(wc1e), vmem_full(beffc),                # wc1 (folded BN), biases
            vmem_full(wc2k), smem,                            # 3x3 taps, bc2
            vmem_full(tapmask),                               # per-tap masks
        ],
        out_specs=pl.BlockSpec((nb, C, HW), lambda n: (n, 0, 0)),
        compiler_params=pltpu.CompilerParams(
            dimension_semantics=("parallel",),
            vmem_limit_bytes=32 * 1024 * 1024),
    )(xf, w1, b1, w2t, b2, wc1e, beffc, wc2k, bc2, tapmask)
    return out[:N].reshape(N, C, H, W)


def cbam_ref(x, p, eps=1e-5):
    """Pure-JAX reference mirroring the PyTorch forward (BN in eval mode)."""
    pooled = x.mean(axis=(2, 3))                                   # (N, C)
    h1 = jax.nn.relu(pooled @ p['w1'].T + p['b1'])
    raw = h1 @ p['w2'].T + p['b2']
    att = jax.nn.softmax(raw, axis=1)[:, :, None, None]
    xc = x * att
    y = jnp.einsum('sc,nchw->nshw', p['wc1'], xc) + p['bc1'][None, :, None, None]
    y = (y - p['mean'][None, :, None, None]) / jnp.sqrt(p['var'] + eps)[None, :, None, None]
    y = y * p['gamma'][None, :, None, None] + p['beta'][None, :, None, None]
    y = jax.nn.relu(y)
    s = jax.lax.conv_general_dilated(
        y, p['wc2'][None], (1, 1), 'SAME',
        dimension_numbers=('NCHW', 'OIHW', 'NCHW'))
    s = jax.nn.sigmoid(s + p['bc2'][None, :, None, None])
    return xc * s


if __name__ == "__main__":
    N, C, H, W = 2, 32, 16, 16          # gate_channels = 32
    Cr = C // 8                          # channel MLP hidden = 4
    Cs = C // 16                         # spatial reduced channels = 2

    key = jax.random.PRNGKey(0)
    ks = jax.random.split(key, 13)
    x = jax.random.normal(ks[0], (N, C, H, W), jnp.float32)

    params = {
        'w1':  0.3 * jax.random.normal(ks[1], (Cr, C), jnp.float32),
        'b1':  0.1 * jax.random.normal(ks[2], (Cr,), jnp.float32),
        'w2':  0.3 * jax.random.normal(ks[3], (C, Cr), jnp.float32),
        'b2':  0.1 * jax.random.normal(ks[4], (C,), jnp.float32),
        'wc1': 0.3 * jax.random.normal(ks[5], (Cs, C), jnp.float32),
        'bc1': 0.1 * jax.random.normal(ks[6], (Cs,), jnp.float32),
        'gamma': 1.0 + 0.1 * jax.random.normal(ks[7], (Cs,), jnp.float32),
        'beta': 0.1 * jax.random.normal(ks[8], (Cs,), jnp.float32),
        'mean': 0.1 * jax.random.normal(ks[9], (Cs,), jnp.float32),
        'var': jax.random.uniform(ks[10], (Cs,), jnp.float32, 0.5, 1.5),
        'wc2': 0.3 * jax.random.normal(ks[11], (Cs, 3, 3), jnp.float32),
        'bc2': 0.05 * jnp.ones((1,), jnp.float32),
    }

    out = cbam_pallas(x, params)
    jax.block_until_ready(out)

    ref = cbam_ref(x, params)
    np.testing.assert_allclose(np.asarray(out), np.asarray(ref),
                               rtol=2e-3, atol=2e-3)
    print("KERNEL_OK")
</pallas_src>

<mosaic_0001>
module attributes {stable_mosaic.version = 11 : i64} {
  func.func @cbam_kernel(%arg0: i32, %arg1: memref<1x32x256xf32, #tpu.memory_space<vmem>>, %arg2: memref<4x32x1xf32, #tpu.memory_space<vmem>>, %arg3: memref<4xf32, #tpu.memory_space<smem>>, %arg4: memref<4x32x1xf32, #tpu.memory_space<vmem>>, %arg5: memref<32x1xf32, #tpu.memory_space<vmem>>, %arg6: memref<2x32xf32, #tpu.memory_space<vmem>>, %arg7: memref<2x1xf32, #tpu.memory_space<vmem>>, %arg8: memref<9x2x1xf32, #tpu.memory_space<vmem>>, %arg9: memref<1xf32, #tpu.memory_space<smem>>, %arg10: memref<9x1x256xf32, #tpu.memory_space<vmem>>, %arg11: memref<1x32x256xf32, #tpu.memory_space<vmem>>) attributes {dimension_semantics = [#tpu.dimension_semantics<parallel>], iteration_bounds = array<i64: 2>, scalar_prefetch = 0 : i64, scratch_operands = 0 : i64, tpu.core_type = #tpu.core_type<tc>, window_params = [{transform_indices = @transform_0, window_bounds = array<i64: 1, 32, 256>}, {pipeline_mode = #tpu.pipeline_mode<synchronous>, transform_indices = @transform_1, window_bounds = array<i64: 4, 32, 1>}, {transform_indices = @transform_2, window_bounds = array<i64: 4>}, {pipeline_mode = #tpu.pipeline_mode<synchronous>, transform_indices = @transform_3, window_bounds = array<i64: 4, 32, 1>}, {pipeline_mode = #tpu.pipeline_mode<synchronous>, transform_indices = @transform_4, window_bounds = array<i64: 32, 1>}, {pipeline_mode = #tpu.pipeline_mode<synchronous>, transform_indices = @transform_5, window_bounds = array<i64: 2, 32>}, {pipeline_mode = #tpu.pipeline_mode<synchronous>, transform_indices = @transform_6, window_bounds = array<i64: 2, 1>}, {pipeline_mode = #tpu.pipeline_mode<synchronous>, transform_indices = @transform_7, window_bounds = array<i64: 9, 2, 1>}, {transform_indices = @transform_8, window_bounds = array<i64: 1>}, {pipeline_mode = #tpu.pipeline_mode<synchronous>, transform_indices = @transform_9, window_bounds = array<i64: 9, 1, 256>}, {transform_indices = @transform_10, window_bounds = array<i64: 1, 32, 256>}]} {
    %c0 = arith.constant 0 : index
    %c0_0 = arith.constant 0 : index
    %c0_1 = arith.constant 0 : index
    %0 = vector.load %arg1[%c0, %c0_0, %c0_1] : memref<1x32x256xf32, #tpu.memory_space<vmem>>, vector<1x32x256xf32>
    %cst = arith.constant dense<0.000000e+00> : vector<1x32xf32>
    %1 = vector.multi_reduction <add>, %0, %cst [2] : vector<1x32x256xf32> to vector<1x32xf32>
    %2 = vector.shape_cast %1 : vector<1x32xf32> to vector<1x32x1xf32>
    %cst_2 = arith.constant 2.560000e+02 : f32
    %3 = vector.broadcast %cst_2 : f32 to vector<1x32x1xf32>
    %4 = arith.divf %2, %3 : vector<1x32x1xf32>
    %c0_3 = arith.constant 0 : index
    %c0_4 = arith.constant 0 : index
    %5 = vector.load %arg5[%c0_3, %c0_4] : memref<32x1xf32, #tpu.memory_space<vmem>>, vector<32x1xf32>
    %6 = vector.shape_cast %5 : vector<32x1xf32> to vector<1x32x1xf32>
    %c0_5 = arith.constant 0 : index
    %c0_6 = arith.constant 0 : index
    %c0_7 = arith.constant 0 : index
    %7 = vector.load %arg2[%c0_5, %c0_6, %c0_7] : memref<4x32x1xf32, #tpu.memory_space<vmem>>, vector<1x32x1xf32>
    %8 = vector.shape_cast %7 : vector<1x32x1xf32> to vector<32x1xf32>
    %9 = vector.shape_cast %8 : vector<32x1xf32> to vector<1x32x1xf32>
    %10 = arith.mulf %4, %9 : vector<1x32x1xf32>
    %cst_8 = arith.constant dense<0.000000e+00> : vector<1x1xf32>
    %11 = vector.multi_reduction <add>, %10, %cst_8 [1] : vector<1x32x1xf32> to vector<1x1xf32>
    %12 = vector.shape_cast %11 : vector<1x1xf32> to vector<1x1x1xf32>
    %c0_9 = arith.constant 0 : index
    %13 = memref.load %arg3[%c0_9] : memref<4xf32, #tpu.memory_space<smem>>
    %14 = vector.broadcast %13 : f32 to vector<1x1x1xf32>
    %15 = arith.addf %12, %14 : vector<1x1x1xf32>
    %cst_10 = arith.constant 0.000000e+00 : f32
    %16 = vector.broadcast %cst_10 : f32 to vector<1x1x1xf32>
    %17 = arith.maximumf %15, %16 : vector<1x1x1xf32>
    %c0_11 = arith.constant 0 : index
    %c0_12 = arith.constant 0 : index
    %c0_13 = arith.constant 0 : index
    %18 = vector.load %arg4[%c0_11, %c0_12, %c0_13] : memref<4x32x1xf32, #tpu.memory_space<vmem>>, vector<1x32x1xf32>
    %19 = vector.shape_cast %18 : vector<1x32x1xf32> to vector<32x1xf32>
    %20 = vector.shape_cast %19 : vector<32x1xf32> to vector<1x32x1xf32>
    %21 = vector.broadcast %17 : vector<1x1x1xf32> to vector<1x32x1xf32>
    %22 = arith.mulf %21, %20 : vector<1x32x1xf32>
    %23 = arith.addf %6, %22 : vector<1x32x1xf32>
    %c1 = arith.constant 1 : index
    %c0_14 = arith.constant 0 : index
    %c0_15 = arith.constant 0 : index
    %24 = vector.load %arg2[%c1, %c0_14, %c0_15] : memref<4x32x1xf32, #tpu.memory_space<vmem>>, vector<1x32x1xf32>
    %25 = vector.shape_cast %24 : vector<1x32x1xf32> to vector<32x1xf32>
    %26 = vector.shape_cast %25 : vector<32x1xf32> to vector<1x32x1xf32>
    %27 = arith.mulf %4, %26 : vector<1x32x1xf32>
    %cst_16 = arith.constant dense<0.000000e+00> : vector<1x1xf32>
    %28 = vector.multi_reduction <add>, %27, %cst_16 [1] : vector<1x32x1xf32> to vector<1x1xf32>
    %29 = vector.shape_cast %28 : vector<1x1xf32> to vector<1x1x1xf32>
    %c1_17 = arith.constant 1 : index
    %30 = memref.load %arg3[%c1_17] : memref<4xf32, #tpu.memory_space<smem>>
    %31 = vector.broadcast %30 : f32 to vector<1x1x1xf32>
    %32 = arith.addf %29, %31 : vector<1x1x1xf32>
    %cst_18 = arith.constant 0.000000e+00 : f32
    %33 = vector.broadcast %cst_18 : f32 to vector<1x1x1xf32>
    %34 = arith.maximumf %32, %33 : vector<1x1x1xf32>
    %c1_19 = arith.constant 1 : index
    %c0_20 = arith.constant 0 : index
    %c0_21 = arith.constant 0 : index
    %35 = vector.load %arg4[%c1_19, %c0_20, %c0_21] : memref<4x32x1xf32, #tpu.memory_space<vmem>>, vector<1x32x1xf32>
    %36 = vector.shape_cast %35 : vector<1x32x1xf32> to vector<32x1xf32>
    %37 = vector.shape_cast %36 : vector<32x1xf32> to vector<1x32x1xf32>
    %38 = vector.broadcast %34 : vector<1x1x1xf32> to vector<1x32x1xf32>
    %39 = arith.mulf %38, %37 : vector<1x32x1xf32>
    %40 = arith.addf %23, %39 : vector<1x32x1xf32>
    %c2 = arith.constant 2 : index
    %c0_22 = arith.constant 0 : index
    %c0_23 = arith.constant 0 : index
    %41 = vector.load %arg2[%c2, %c0_22, %c0_23] : memref<4x32x1xf32, #tpu.memory_space<vmem>>, vector<1x32x1xf32>
    %42 = vector.shape_cast %41 : vector<1x32x1xf32> to vector<32x1xf32>
    %43 = vector.shape_cast %42 : vector<32x1xf32> to vector<1x32x1xf32>
    %44 = arith.mulf %4, %43 : vector<1x32x1xf32>
    %cst_24 = arith.constant dense<0.000000e+00> : vector<1x1xf32>
    %45 = vector.multi_reduction <add>, %44, %cst_24 [1] : vector<1x32x1xf32> to vector<1x1xf32>
    %46 = vector.shape_cast %45 : vector<1x1xf32> to vector<1x1x1xf32>
    %c2_25 = arith.constant 2 : index
    %47 = memref.load %arg3[%c2_25] : memref<4xf32, #tpu.memory_space<smem>>
    %48 = vector.broadcast %47 : f32 to vector<1x1x1xf32>
    %49 = arith.addf %46, %48 : vector<1x1x1xf32>
    %cst_26 = arith.constant 0.000000e+00 : f32
    %50 = vector.broadcast %cst_26 : f32 to vector<1x1x1xf32>
    %51 = arith.maximumf %49, %50 : vector<1x1x1xf32>
    %c2_27 = arith.constant 2 : index
    %c0_28 = arith.constant 0 : index
    %c0_29 = arith.constant 0 : index
    %52 = vector.load %arg4[%c2_27, %c0_28, %c0_29] : memref<4x32x1xf32, #tpu.memory_space<vmem>>, vector<1x32x1xf32>
    %53 = vector.shape_cast %52 : vector<1x32x1xf32> to vector<32x1xf32>
    %54 = vector.shape_cast %53 : vector<32x1xf32> to vector<1x32x1xf32>
    %55 = vector.broadcast %51 : vector<1x1x1xf32> to vector<1x32x1xf32>
    %56 = arith.mulf %55, %54 : vector<1x32x1xf32>
    %57 = arith.addf %40, %56 : vector<1x32x1xf32>
    %c3 = arith.constant 3 : index
    %c0_30 = arith.constant 0 : index
    %c0_31 = arith.constant 0 : index
    %58 = vector.load %arg2[%c3, %c0_30, %c0_31] : memref<4x32x1xf32, #tpu.memory_space<vmem>>, vector<1x32x1xf32>
    %59 = vector.shape_cast %58 : vector<1x32x1xf32> to vector<32x1xf32>
    %60 = vector.shape_cast %59 : vector<32x1xf32> to vector<1x32x1xf32>
    %61 = arith.mulf %4, %60 : vector<1x32x1xf32>
    %cst_32 = arith.constant dense<0.000000e+00> : vector<1x1xf32>
    %62 = vector.multi_reduction <add>, %61, %cst_32 [1] : vector<1x32x1xf32> to vector<1x1xf32>
    %63 = vector.shape_cast %62 : vector<1x1xf32> to vector<1x1x1xf32>
    %c3_33 = arith.constant 3 : index
    %64 = memref.load %arg3[%c3_33] : memref<4xf32, #tpu.memory_space<smem>>
    %65 = vector.broadcast %64 : f32 to vector<1x1x1xf32>
    %66 = arith.addf %63, %65 : vector<1x1x1xf32>
    %cst_34 = arith.constant 0.000000e+00 : f32
    %67 = vector.broadcast %cst_34 : f32 to vector<1x1x1xf32>
    %68 = arith.maximumf %66, %67 : vector<1x1x1xf32>
    %c3_35 = arith.constant 3 : index
    %c0_36 = arith.constant 0 : index
    %c0_37 = arith.constant 0 : index
    %69 = vector.load %arg4[%c3_35, %c0_36, %c0_37] : memref<4x32x1xf32, #tpu.memory_space<vmem>>, vector<1x32x1xf32>
    %70 = vector.shape_cast %69 : vector<1x32x1xf32> to vector<32x1xf32>
    %71 = vector.shape_cast %70 : vector<32x1xf32> to vector<1x32x1xf32>
    %72 = vector.broadcast %68 : vector<1x1x1xf32> to vector<1x32x1xf32>
    %73 = arith.mulf %72, %71 : vector<1x32x1xf32>
    %74 = arith.addf %57, %73 : vector<1x32x1xf32>
    %cst_38 = arith.constant dense<0xFF800000> : vector<1x1xf32>
    %75 = vector.multi_reduction <maximumf>, %74, %cst_38 [1] : vector<1x32x1xf32> to vector<1x1xf32>
    %76 = vector.shape_cast %75 : vector<1x1xf32> to vector<1x1x1xf32>
    %77 = vector.broadcast %76 : vector<1x1x1xf32> to vector<1x32x1xf32>
    %78 = arith.subf %74, %77 : vector<1x32x1xf32>
    %79 = math.exp %78 : vector<1x32x1xf32>
    %cst_39 = arith.constant dense<0.000000e+00> : vector<1x1xf32>
    %80 = vector.multi_reduction <add>, %79, %cst_39 [1] : vector<1x32x1xf32> to vector<1x1xf32>
    %81 = vector.shape_cast %80 : vector<1x1xf32> to vector<1x1x1xf32>
    %82 = vector.broadcast %81 : vector<1x1x1xf32> to vector<1x32x1xf32>
    %83 = arith.divf %79, %82 : vector<1x32x1xf32>
    %84 = vector.broadcast %83 : vector<1x32x1xf32> to vector<1x32x256xf32>
    %85 = arith.mulf %0, %84 : vector<1x32x256xf32>
    %c0_40 = arith.constant 0 : index
    %c0_41 = arith.constant 0 : index
    %86 = vector.load %arg6[%c0_40, %c0_41] : memref<2x32xf32, #tpu.memory_space<vmem>>, vector<2x32xf32>
    %87 = vector.shape_cast %86 : vector<2x32xf32> to vector<1x2x32xf32>
    "tpu.trace_start"() <{level = 10 : i32, message = "nsc,ncp->nsp"}> : () -> ()
    %cst_42 = arith.constant dense<0.000000e+00> : vector<1x2x256xf32>
    %88 = tpu.matmul %87, %85, %cst_42 {dimension_numbers = #tpu.dot_dimension_numbers<[2], [1], [1], [2], [0, 0, 0, 1, 1, 2], [0], [0]>} : vector<1x2x32xf32>, vector<1x32x256xf32>, vector<1x2x256xf32> -> vector<1x2x256xf32>
    "tpu.trace_stop"() : () -> ()
    %c0_43 = arith.constant 0 : index
    %c0_44 = arith.constant 0 : index
    %89 = vector.load %arg7[%c0_43, %c0_44] : memref<2x1xf32, #tpu.memory_space<vmem>>, vector<2x1xf32>
    %90 = vector.shape_cast %89 : vector<2x1xf32> to vector<1x2x1xf32>
    %91 = vector.broadcast %90 : vector<1x2x1xf32> to vector<1x2x256xf32>
    %92 = arith.addf %88, %91 : vector<1x2x256xf32>
    %cst_45 = arith.constant 0.000000e+00 : f32
    %93 = vector.broadcast %cst_45 : f32 to vector<1x2x256xf32>
    %94 = arith.maximumf %92, %93 : vector<1x2x256xf32>
    %c4 = arith.constant 4 : index
    %c0_46 = arith.constant 0 : index
    %c0_47 = arith.constant 0 : index
    %95 = vector.load %arg8[%c4, %c0_46, %c0_47] : memref<9x2x1xf32, #tpu.memory_space<vmem>>, vector<1x2x1xf32>
    %96 = vector.shape_cast %95 : vector<1x2x1xf32> to vector<2x1xf32>
    %97 = vector.shape_cast %96 : vector<2x1xf32> to vector<1x2x1xf32>
    %98 = vector.broadcast %97 : vector<1x2x1xf32> to vector<1x2x256xf32>
    %99 = arith.mulf %94, %98 : vector<1x2x256xf32>
    %cst_48 = arith.constant dense<0.000000e+00> : vector<1x256xf32>
    %100 = vector.multi_reduction <add>, %99, %cst_48 [1] : vector<1x2x256xf32> to vector<1x256xf32>
    %101 = vector.shape_cast %100 : vector<1x256xf32> to vector<1x1x256xf32>
    %c0_49 = arith.constant 0 : index
    %102 = memref.load %arg9[%c0_49] : memref<1xf32, #tpu.memory_space<smem>>
    %103 = vector.broadcast %102 : f32 to vector<1x1x256xf32>
    %104 = arith.addf %101, %103 : vector<1x1x256xf32>
    %c0_50 = arith.constant 0 : index
    %c0_51 = arith.constant 0 : index
    %c0_52 = arith.constant 0 : index
    %105 = vector.load %arg8[%c0_50, %c0_51, %c0_52] : memref<9x2x1xf32, #tpu.memory_space<vmem>>, vector<1x2x1xf32>
    %106 = vector.shape_cast %105 : vector<1x2x1xf32> to vector<2x1xf32>
    %107 = vector.shape_cast %106 : vector<2x1xf32> to vector<1x2x1xf32>
    %108 = vector.broadcast %107 : vector<1x2x1xf32> to vector<1x2x256xf32>
    %109 = arith.mulf %94, %108 : vector<1x2x256xf32>
    %cst_53 = arith.constant dense<0.000000e+00> : vector<1x256xf32>
    %110 = vector.multi_reduction <add>, %109, %cst_53 [1] : vector<1x2x256xf32> to vector<1x256xf32>
    %111 = vector.shape_cast %110 : vector<1x256xf32> to vector<1x1x256xf32>
    %c17_i32 = arith.constant 17 : i32
    %112 = tpu.dynamic_rotate %111 by %c17_i32 dim 2 : vector<1x1x256xf32>, i32 -> vector<1x1x256xf32>
    %c0_54 = arith.constant 0 : index
    %c0_55 = arith.constant 0 : index
    %c0_56 = arith.constant 0 : index
    %113 = vector.load %arg10[%c0_54, %c0_55, %c0_56] : memref<9x1x256xf32, #tpu.memory_space<vmem>>, vector<1x1x256xf32>
    %114 = vector.shape_cast %113 : vector<1x1x256xf32> to vector<1x256xf32>
    %115 = vector.shape_cast %114 : vector<1x256xf32> to vector<1x1x256xf32>
    %116 = arith.mulf %112, %115 : vector<1x1x256xf32>
    %117 = arith.addf %104, %116 : vector<1x1x256xf32>
    %c1_57 = arith.constant 1 : index
    %c0_58 = arith.constant 0 : index
    %c0_59 = arith.constant 0 : index
    %118 = vector.load %arg8[%c1_57, %c0_58, %c0_59] : memref<9x2x1xf32, #tpu.memory_space<vmem>>, vector<1x2x1xf32>
    %119 = vector.shape_cast %118 : vector<1x2x1xf32> to vector<2x1xf32>
    %120 = vector.shape_cast %119 : vector<2x1xf32> to vector<1x2x1xf32>
    %121 = vector.broadcast %120 : vector<1x2x1xf32> to vector<1x2x256xf32>
    %122 = arith.mulf %94, %121 : vector<1x2x256xf32>
    %cst_60 = arith.constant dense<0.000000e+00> : vector<1x256xf32>
    %123 = vector.multi_reduction <add>, %122, %cst_60 [1] : vector<1x2x256xf32> to vector<1x256xf32>
    %124 = vector.shape_cast %123 : vector<1x256xf32> to vector<1x1x256xf32>
    %c16_i32 = arith.constant 16 : i32
    %125 = tpu.dynamic_rotate %124 by %c16_i32 dim 2 : vector<1x1x256xf32>, i32 -> vector<1x1x256xf32>
    %c1_61 = arith.constant 1 : index
    %c0_62 = arith.constant 0 : index
    %c0_63 = arith.constant 0 : index
    %126 = vector.load %arg10[%c1_61, %c0_62, %c0_63] : memref<9x1x256xf32, #tpu.memory_space<vmem>>, vector<1x1x256xf32>
    %127 = vector.shape_cast %126 : vector<1x1x256xf32> to vector<1x256xf32>
    %128 = vector.shape_cast %127 : vector<1x256xf32> to vector<1x1x256xf32>
    %129 = arith.mulf %125, %128 : vector<1x1x256xf32>
    %130 = arith.addf %117, %129 : vector<1x1x256xf32>
    %c2_64 = arith.constant 2 : index
    %c0_65 = arith.constant 0 : index
    %c0_66 = arith.constant 0 : index
    %131 = vector.load %arg8[%c2_64, %c0_65, %c0_66] : memref<9x2x1xf32, #tpu.memory_space<vmem>>, vector<1x2x1xf32>
    %132 = vector.shape_cast %131 : vector<1x2x1xf32> to vector<2x1xf32>
    %133 = vector.shape_cast %132 : vector<2x1xf32> to vector<1x2x1xf32>
    %134 = vector.broadcast %133 : vector<1x2x1xf32> to vector<1x2x256xf32>
    %135 = arith.mulf %94, %134 : vector<1x2x256xf32>
    %cst_67 = arith.constant dense<0.000000e+00> : vector<1x256xf32>
    %136 = vector.multi_reduction <add>, %135, %cst_67 [1] : vector<1x2x256xf32> to vector<1x256xf32>
    %137 = vector.shape_cast %136 : vector<1x256xf32> to vector<1x1x256xf32>
    %c15_i32 = arith.constant 15 : i32
    %138 = tpu.dynamic_rotate %137 by %c15_i32 dim 2 : vector<1x1x256xf32>, i32 -> vector<1x1x256xf32>
    %c2_68 = arith.constant 2 : index
    %c0_69 = arith.constant 0 : index
    %c0_70 = arith.constant 0 : index
    %139 = vector.load %arg10[%c2_68, %c0_69, %c0_70] : memref<9x1x256xf32, #tpu.memory_space<vmem>>, vector<1x1x256xf32>
    %140 = vector.shape_cast %139 : vector<1x1x256xf32> to vector<1x256xf32>
    %141 = vector.shape_cast %140 : vector<1x256xf32> to vector<1x1x256xf32>
    %142 = arith.mulf %138, %141 : vector<1x1x256xf32>
    %143 = arith.addf %130, %142 : vector<1x1x256xf32>
    %c3_71 = arith.constant 3 : index
    %c0_72 = arith.constant 0 : index
    %c0_73 = arith.constant 0 : index
    %144 = vector.load %arg8[%c3_71, %c0_72, %c0_73] : memref<9x2x1xf32, #tpu.memory_space<vmem>>, vector<1x2x1xf32>
    %145 = vector.shape_cast %144 : vector<1x2x1xf32> to vector<2x1xf32>
    %146 = vector.shape_cast %145 : vector<2x1xf32> to vector<1x2x1xf32>
    %147 = vector.broadcast %146 : vector<1x2x1xf32> to vector<1x2x256xf32>
    %148 = arith.mulf %94, %147 : vector<1x2x256xf32>
    %cst_74 = arith.constant dense<0.000000e+00> : vector<1x256xf32>
    %149 = vector.multi_reduction <add>, %148, %cst_74 [1] : vector<1x2x256xf32> to vector<1x256xf32>
    %150 = vector.shape_cast %149 : vector<1x256xf32> to vector<1x1x256xf32>
    %c1_i32 = arith.constant 1 : i32
    %151 = tpu.dynamic_rotate %150 by %c1_i32 dim 2 : vector<1x1x256xf32>, i32 -> vector<1x1x256xf32>
    %c3_75 = arith.constant 3 : index
    %c0_76 = arith.constant 0 : index
    %c0_77 = arith.constant 0 : index
    %152 = vector.load %arg10[%c3_75, %c0_76, %c0_77] : memref<9x1x256xf32, #tpu.memory_space<vmem>>, vector<1x1x256xf32>
    %153 = vector.shape_cast %152 : vector<1x1x256xf32> to vector<1x256xf32>
    %154 = vector.shape_cast %153 : vector<1x256xf32> to vector<1x1x256xf32>
    %155 = arith.mulf %151, %154 : vector<1x1x256xf32>
    %156 = arith.addf %143, %155 : vector<1x1x256xf32>
    %c5 = arith.constant 5 : index
    %c0_78 = arith.constant 0 : index
    %c0_79 = arith.constant 0 : index
    %157 = vector.load %arg8[%c5, %c0_78, %c0_79] : memref<9x2x1xf32, #tpu.memory_space<vmem>>, vector<1x2x1xf32>
    %158 = vector.shape_cast %157 : vector<1x2x1xf32> to vector<2x1xf32>
    %159 = vector.shape_cast %158 : vector<2x1xf32> to vector<1x2x1xf32>
    %160 = vector.broadcast %159 : vector<1x2x1xf32> to vector<1x2x256xf32>
    %161 = arith.mulf %94, %160 : vector<1x2x256xf32>
    %cst_80 = arith.constant dense<0.000000e+00> : vector<1x256xf32>
    %162 = vector.multi_reduction <add>, %161, %cst_80 [1] : vector<1x2x256xf32> to vector<1x256xf32>
    %163 = vector.shape_cast %162 : vector<1x256xf32> to vector<1x1x256xf32>
    %c255_i32 = arith.constant 255 : i32
    %164 = tpu.dynamic_rotate %163 by %c255_i32 dim 2 : vector<1x1x256xf32>, i32 -> vector<1x1x256xf32>
    %c5_81 = arith.constant 5 : index
    %c0_82 = arith.constant 0 : index
    %c0_83 = arith.constant 0 : index
    %165 = vector.load %arg10[%c5_81, %c0_82, %c0_83] : memref<9x1x256xf32, #tpu.memory_space<vmem>>, vector<1x1x256xf32>
    %166 = vector.shape_cast %165 : vector<1x1x256xf32> to vector<1x256xf32>
    %167 = vector.shape_cast %166 : vector<1x256xf32> to vector<1x1x256xf32>
    %168 = arith.mulf %164, %167 : vector<1x1x256xf32>
    %169 = arith.addf %156, %168 : vector<1x1x256xf32>
    %c6 = arith.constant 6 : index
    %c0_84 = arith.constant 0 : index
    %c0_85 = arith.constant 0 : index
    %170 = vector.load %arg8[%c6, %c0_84, %c0_85] : memref<9x2x1xf32, #tpu.memory_space<vmem>>, vector<1x2x1xf32>
    %171 = vector.shape_cast %170 : vector<1x2x1xf32> to vector<2x1xf32>
    %172 = vector.shape_cast %171 : vector<2x1xf32> to vector<1x2x1xf32>
    %173 = vector.broadcast %172 : vector<1x2x1xf32> to vector<1x2x256xf32>
    %174 = arith.mulf %94, %173 : vector<1x2x256xf32>
    %cst_86 = arith.constant dense<0.000000e+00> : vector<1x256xf32>
    %175 = vector.multi_reduction <add>, %174, %cst_86 [1] : vector<1x2x256xf32> to vector<1x256xf32>
    %176 = vector.shape_cast %175 : vector<1x256xf32> to vector<1x1x256xf32>
    %c241_i32 = arith.constant 241 : i32
    %177 = tpu.dynamic_rotate %176 by %c241_i32 dim 2 : vector<1x1x256xf32>, i32 -> vector<1x1x256xf32>
    %c6_87 = arith.constant 6 : index
    %c0_88 = arith.constant 0 : index
    %c0_89 = arith.constant 0 : index
    %178 = vector.load %arg10[%c6_87, %c0_88, %c0_89] : memref<9x1x256xf32, #tpu.memory_space<vmem>>, vector<1x1x256xf32>
    %179 = vector.shape_cast %178 : vector<1x1x256xf32> to vector<1x256xf32>
    %180 = vector.shape_cast %179 : vector<1x256xf32> to vector<1x1x256xf32>
    %181 = arith.mulf %177, %180 : vector<1x1x256xf32>
    %182 = arith.addf %169, %181 : vector<1x1x256xf32>
    %c7 = arith.constant 7 : index
    %c0_90 = arith.constant 0 : index
    %c0_91 = arith.constant 0 : index
    %183 = vector.load %arg8[%c7, %c0_90, %c0_91] : memref<9x2x1xf32, #tpu.memory_space<vmem>>, vector<1x2x1xf32>
    %184 = vector.shape_cast %183 : vector<1x2x1xf32> to vector<2x1xf32>
    %185 = vector.shape_cast %184 : vector<2x1xf32> to vector<1x2x1xf32>
    %186 = vector.broadcast %185 : vector<1x2x1xf32> to vector<1x2x256xf32>
    %187 = arith.mulf %94, %186 : vector<1x2x256xf32>
    %cst_92 = arith.constant dense<0.000000e+00> : vector<1x256xf32>
    %188 = vector.multi_reduction <add>, %187, %cst_92 [1] : vector<1x2x256xf32> to vector<1x256xf32>
    %189 = vector.shape_cast %188 : vector<1x256xf32> to vector<1x1x256xf32>
    %c240_i32 = arith.constant 240 : i32
    %190 = tpu.dynamic_rotate %189 by %c240_i32 dim 2 : vector<1x1x256xf32>, i32 -> vector<1x1x256xf32>
    %c7_93 = arith.constant 7 : index
    %c0_94 = arith.constant 0 : index
    %c0_95 = arith.constant 0 : index
    %191 = vector.load %arg10[%c7_93, %c0_94, %c0_95] : memref<9x1x256xf32, #tpu.memory_space<vmem>>, vector<1x1x256xf32>
    %192 = vector.shape_cast %191 : vector<1x1x256xf32> to vector<1x256xf32>
    %193 = vector.shape_cast %192 : vector<1x256xf32> to vector<1x1x256xf32>
    %194 = arith.mulf %190, %193 : vector<1x1x256xf32>
    %195 = arith.addf %182, %194 : vector<1x1x256xf32>
    %c8 = arith.constant 8 : index
    %c0_96 = arith.constant 0 : index
    %c0_97 = arith.constant 0 : index
    %196 = vector.load %arg8[%c8, %c0_96, %c0_97] : memref<9x2x1xf32, #tpu.memory_space<vmem>>, vector<1x2x1xf32>
    %197 = vector.shape_cast %196 : vector<1x2x1xf32> to vector<2x1xf32>
    %198 = vector.shape_cast %197 : vector<2x1xf32> to vector<1x2x1xf32>
    %199 = vector.broadcast %198 : vector<1x2x1xf32> to vector<1x2x256xf32>
    %200 = arith.mulf %94, %199 : vector<1x2x256xf32>
    %cst_98 = arith.constant dense<0.000000e+00> : vector<1x256xf32>
    %201 = vector.multi_reduction <add>, %200, %cst_98 [1] : vector<1x2x256xf32> to vector<1x256xf32>
    %202 = vector.shape_cast %201 : vector<1x256xf32> to vector<1x1x256xf32>
    %c239_i32 = arith.constant 239 : i32
    %203 = tpu.dynamic_rotate %202 by %c239_i32 dim 2 : vector<1x1x256xf32>, i32 -> vector<1x1x256xf32>
    %c8_99 = arith.constant 8 : index
    %c0_100 = arith.constant 0 : index
    %c0_101 = arith.constant 0 : index
    %204 = vector.load %arg10[%c8_99, %c0_100, %c0_101] : memref<9x1x256xf32, #tpu.memory_space<vmem>>, vector<1x1x256xf32>
    %205 = vector.shape_cast %204 : vector<1x1x256xf32> to vector<1x256xf32>
    %206 = vector.shape_cast %205 : vector<1x256xf32> to vector<1x1x256xf32>
    %207 = arith.mulf %203, %206 : vector<1x1x256xf32>
    %208 = arith.addf %195, %207 : vector<1x1x256xf32>
    %209 = arith.negf %208 : vector<1x1x256xf32>
    %210 = math.exp %209 : vector<1x1x256xf32>
    %cst_102 = arith.constant 1.000000e+00 : f32
    %211 = vector.broadcast %cst_102 : f32 to vector<1x1x256xf32>
    %212 = arith.addf %211, %210 : vector<1x1x256xf32>
    %213 = arith.divf %211, %212 : vector<1x1x256xf32>
    %214 = vector.broadcast %213 : vector<1x1x256xf32> to vector<1x32x256xf32>
    %215 = arith.mulf %85, %214 : vector<1x32x256xf32>
    %c0_103 = arith.constant 0 : index
    %c0_104 = arith.constant 0 : index
    %c0_105 = arith.constant 0 : index
    %216 = vector.load %arg11[%c0_103, %c0_104, %c0_105] : memref<1x32x256xf32, #tpu.memory_space<vmem>>, vector<1x32x256xf32>
    tpu.vector_store %arg11[%c0_103, %c0_104, %c0_105], %215 {strides = array<i32>} : memref<1x32x256xf32, #tpu.memory_space<vmem>>, vector<1x32x256xf32>,
    return
  }
  func.func @transform_0(%arg0: i32) -> (i32, i32, i32) {
    %c0_i32 = arith.constant 0 : i32
    %c0_i32_0 = arith.constant 0 : i32
    %c0_i32_1 = arith.constant 0 : i32
    return %arg0, %c0_i32, %c0_i32_0 : i32, i32, i32
  }
  func.func @transform_1(%arg0: i32) -> (i32, i32, i32) {
    %c0_i32 = arith.constant 0 : i32
    %c0_i32_0 = arith.constant 0 : i32
    %c0_i32_1 = arith.constant 0 : i32
    %c0_i32_2 = arith.constant 0 : i32
    return %c0_i32, %c0_i32_0, %c0_i32_1 : i32, i32, i32
  }
  func.func @transform_2(%arg0: i32) -> i32 {
    %c0_i32 = arith.constant 0 : i32
    %c0_i32_0 = arith.constant 0 : i32
    return %c0_i32 : i32
  }
  func.func @transform_3(%arg0: i32) -> (i32, i32, i32) {
    %c0_i32 = arith.constant 0 : i32
    %c0_i32_0 = arith.constant 0 : i32
    %c0_i32_1 = arith.constant 0 : i32
    %c0_i32_2 = arith.constant 0 : i32
    return %c0_i32, %c0_i32_0, %c0_i32_1 : i32, i32, i32
  }
  func.func @transform_4(%arg0: i32) -> (i32, i32) {
    %c0_i32 = arith.constant 0 : i32
    %c0_i32_0 = arith.constant 0 : i32
    %c0_i32_1 = arith.constant 0 : i32
    return %c0_i32, %c0_i32_0 : i32, i32
  }
  func.func @transform_5(%arg0: i32) -> (i32, i32) {
    %c0_i32 = arith.constant 0 : i32
    %c0_i32_0 = arith.constant 0 : i32
    %c0_i32_1 = arith.constant 0 : i32
    return %c0_i32, %c0_i32_0 : i32, i32
  }
  func.func @transform_6(%arg0: i32) -> (i32, i32) {
    %c0_i32 = arith.constant 0 : i32
    %c0_i32_0 = arith.constant 0 : i32
    %c0_i32_1 = arith.constant 0 : i32
    return %c0_i32, %c0_i32_0 : i32, i32
  }
  func.func @transform_7(%arg0: i32) -> (i32, i32, i32) {
    %c0_i32 = arith.constant 0 : i32
    %c0_i32_0 = arith.constant 0 : i32
    %c0_i32_1 = arith.constant 0 : i32
    %c0_i32_2 = arith.constant 0 : i32
    return %c0_i32, %c0_i32_0, %c0_i32_1 : i32, i32, i32
  }
  func.func @transform_8(%arg0: i32) -> i32 {
    %c0_i32 = arith.constant 0 : i32
    %c0_i32_0 = arith.constant 0 : i32
    return %c0_i32 : i32
  }
  func.func @transform_9(%arg0: i32) -> (i32, i32, i32) {
    %c0_i32 = arith.constant 0 : i32
    %c0_i32_0 = arith.constant 0 : i32
    %c0_i32_1 = arith.constant 0 : i32
    %c0_i32_2 = arith.constant 0 : i32
    return %c0_i32, %c0_i32_0, %c0_i32_1 : i32, i32, i32
  }
  func.func @transform_10(%arg0: i32) -> (i32, i32, i32) {
    %c0_i32 = arith.constant 0 : i32
    %c0_i32_0 = arith.constant 0 : i32
    %c0_i32_1 = arith.constant 0 : i32
    return %arg0, %c0_i32, %c0_i32_0 : i32, i32, i32
  }
}

</mosaic_0001>

<llo_original>
// kernel: tpu_custom_call.1
$region0: #{tpu_custom_call.1}
  #allocation0 [shape = 'u32[]', space=smem, size = 0x4, offset = 0x4, fixed_abs, tag = 'smem constant byte address 0x4 - core index']
  #allocation1 [shape = 'u32[144,128]{1,0:T(1,128)}', space=vmem, size = 0x12000, scoped, tag = 'internal scratch']
  #allocation2 [shape = 'f32[1]{0:T(128)S(6)}', space=smem, size = 0x200, scoped, tag = 'scoped memory for tpu_custom_call.1']
  %s0 = inlined_call_operand.vmem [shape: f32[2,32,256], index: 0, kind: input, shape index: {}]
  %s1 = inlined_call_operand.vmem [shape: f32[4,32,1], index: 1, kind: input, shape index: {}]
  %s2 = inlined_call_operand.vmem [shape: f32[4], index: 2, kind: input, shape index: {}]
  %s3 = inlined_call_operand.vmem [shape: f32[4,32,1], index: 3, kind: input, shape index: {}]
  %s4 = inlined_call_operand.vmem [shape: f32[32,1], index: 4, kind: input, shape index: {}]
  %s5 = inlined_call_operand.vmem [shape: f32[2,32], index: 5, kind: input, shape index: {}]
  %s6 = inlined_call_operand.vmem [shape: f32[2,1], index: 6, kind: input, shape index: {}]
  %s7 = inlined_call_operand.vmem [shape: f32[9,2,1], index: 7, kind: input, shape index: {}]
  %s8 = inlined_call_operand.<no memory space> [shape: f32[1], index: 8, kind: input, shape index: {}]
  %s9 = inlined_call_operand.vmem [shape: f32[9,1,256], index: 9, kind: input, shape index: {}]
  %s10 = inlined_call_operand.hbm [shape: f32[2,32,256], index: 10, kind: output, shape index: {}]
  %s11 = sld [smem:[#allocation0]]
  $region77: #{tpu_custom_call.1} parent=0
    _
  %s13 = ssub.s32 1, %s11
  %s14 = scalar_select 0, %s13, %s11
  %15 = sst [smem:[#allocation2]] %s8
  $region1: #{tpu_custom_call.1} parent=0
    #allocation3 [shape = 'u8[512]{0}', space=smem, size = 0x200, scoped, tag = 'input window, operand 2, single buffered']
    #allocation4 [shape = 's32[2]{0}', space=sflag, size = 0x8, scoped, tag = 'scoped memory for tpu_custom_call.1']
    #allocation5 [shape = 's32[2]{0}', space=sflag, size = 0x8, scoped, tag = 'scoped memory for tpu_custom_call.1']
    #allocation6 [shape = 'u8[65536]{0}', space=vmem, size = 0x10000, scoped, tag = 'output window, operand 0']
    %16 = vsyncpa [#allocation5], 0
    %17 = vsyncpa [#allocation4], 0
    %s18 = scalar_lea.sflag [#allocation4], 1
    %19 = vsyncpa %s18, 0
    loop: start=0, step=1, limit=4
    $region2: #{tpu_custom_call.1} parent=1 // loop_pre_header
      _
    $region3: #{tpu_custom_call.1} parent=1 // loop_header
      %s21 = sphi 0, %s25
      %p22 = scmp.ge.s32.totalorder %s21, 4
      %s31 = sphi 0, %s33
      %s34 = sphi 0, %s31
      %s35 = sphi 0, %s34
      %s51 = sphi 0, %s35
      %s55 = sphi 0, %s55
      %s57 = sphi 0, %s55
      %s58 = sphi 0, %s57
      %s72 = sphi 0, %s58
      %s76 = sphi 0, %s76
      %s78 = sphi 0, %s76
      %s79 = sphi 0, %s78
      %s93 = sphi 0, %s79
      %s97 = sphi 0, %s97
      %s99 = sphi 0, %s97
      %s100 = sphi 0, %s99
      %s114 = sphi 0, %s100
      %s118 = sphi 0, %s118
      %s120 = sphi 0, %s118
      %s121 = sphi 0, %s120
      %s135 = sphi 0, %s121
      %s139 = sphi 0, %s139
      %s141 = sphi 0, %s139
      %s142 = sphi 0, %s141
      %s156 = sphi 0, %s142
      %s160 = sphi 0, %s160
      %s162 = sphi 0, %s160
      %s163 = sphi 0, %s162
      %s177 = sphi 0, %s163
      %s181 = sphi 0, %s181
      %s183 = sphi 0, %s181
      %s184 = sphi 0, %s183
      %s198 = sphi 0, %s184
      %s202 = sphi 0, %s202
      %s204 = sphi 0, %s202
      %s205 = sphi 0, %s204
      %s219 = sphi 0, %s205
      %s223 = sphi 0, %s223
      %s225 = sphi 0, %s223
      %s226 = sphi 0, %s225
      %s240 = sphi 0, %s226
      %s246 = sphi 0, %s248
      %s249 = sphi 0, %s246
      %s250 = sphi 0, %s249
      %s266 = sphi 0, %s250
    $region4: #{tpu_custom_call.1} parent=1 // loop_header_branch
      %24 = sbr.rel (%p22) target = $region8
    $region5: #{tpu_custom_call.1} parent=1 // loop_body
      %s26 = ssub.s32 %s21, 1
      %s27 = ssub.s32 %s21, 2
      %s28 = sadd.s32 %s21, 1
      %s29 = ssub.s32 %s21, %s28
      %p30 = scmp.eq.s32.totalorder %s29, 0
      %s32 = sadd.s32 %s31, 1
      %s33 = scalar_select %p30, %s31, %s32
      %p36 = pneg %p30
      %p37 = scmp.eq.s32.totalorder %s21, 1
      %p38 = por %p36, %p37
      %p39 = scmp.ne.s32.totalorder %s31, %s34
      %p40 = scmp.eq.s32.totalorder %s21, 0
      %p41 = por %p39, %p40
      %p42 = scmp.ne.s32.totalorder %s31, %s34
      %p43 = scmp.eq.s32.totalorder %s26, 1
      %p44 = por %p42, %p43
      %p45 = scmp.ne.s32.totalorder %s34, %s35
      %p46 = scmp.eq.s32.totalorder %s26, 0
      %p47 = por %p45, %p46
      %p48 = scmp.ne.s32.totalorder %s34, %s35
      %p49 = scmp.eq.s32.totalorder %s27, 1
      %p50 = por %p48, %p49
      %p52 = scmp.ne.s32.totalorder %s35, %s51
      %p53 = scmp.eq.s32.totalorder %s27, 0
      %p54 = por %p52, %p53
      %s56 = sadd.s32 %s55, 1
      %p59 = scmp.eq.s32.totalorder %s21, 1
      %p60 = scmp.ne.s32.totalorder %s55, %s57
      %p61 = scmp.eq.s32.totalorder %s21, 0
      %p62 = por %p60, %p61
      %p63 = scmp.ne.s32.totalorder %s55, %s57
      %p64 = scmp.eq.s32.totalorder %s26, 1
      %p65 = por %p63, %p64
      %p66 = scmp.ne.s32.totalorder %s57, %s58
      %p67 = scmp.eq.s32.totalorder %s26, 0
      %p68 = por %p66, %p67
      %p69 = scmp.ne.s32.totalorder %s57, %s58
      %p70 = scmp.eq.s32.totalorder %s27, 1
      %p71 = por %p69, %p70
      %p73 = scmp.ne.s32.totalorder %s58, %s72
      %p74 = scmp.eq.s32.totalorder %s27, 0
      %p75 = por %p73, %p74
      %s77 = sadd.s32 %s76, 1
      %p80 = scmp.eq.s32.totalorder %s21, 1
      %p81 = scmp.ne.s32.totalorder %s76, %s78
      %p82 = scmp.eq.s32.totalorder %s21, 0
      %p83 = por %p81, %p82
      %p84 = scmp.ne.s32.totalorder %s76, %s78
      %p85 = scmp.eq.s32.totalorder %s26, 1
      %p86 = por %p84, %p85
      %p87 = scmp.ne.s32.totalorder %s78, %s79
      %p88 = scmp.eq.s32.totalorder %s26, 0
      %p89 = por %p87, %p88
      %p90 = scmp.ne.s32.totalorder %s78, %s79
      %p91 = scmp.eq.s32.totalorder %s27, 1
      %p92 = por %p90, %p91
      %p94 = scmp.ne.s32.totalorder %s79, %s93
      %p95 = scmp.eq.s32.totalorder %s27, 0
      %p96 = por %p94, %p95
      %s98 = sadd.s32 %s97, 1
      %p101 = scmp.eq.s32.totalorder %s21, 1
      %p102 = scmp.ne.s32.totalorder %s97, %s99
      %p103 = scmp.eq.s32.totalorder %s21, 0
      %p104 = por %p102, %p103
      %p105 = scmp.ne.s32.totalorder %s97, %s99
      %p106 = scmp.eq.s32.totalorder %s26, 1
      %p107 = por %p105, %p106
      %p108 = scmp.ne.s32.totalorder %s99, %s100
      %p109 = scmp.eq.s32.totalorder %s26, 0
      %p110 = por %p108, %p109
      %p111 = scmp.ne.s32.totalorder %s99, %s100
      %p112 = scmp.eq.s32.totalorder %s27, 1
      %p113 = por %p111, %p112
      %p115 = scmp.ne.s32.totalorder %s100, %s114
      %p116 = scmp.eq.s32.totalorder %s27, 0
      %p117 = por %p115, %p116
      %s119 = sadd.s32 %s118, 1
      %p122 = scmp.eq.s32.totalorder %s21, 1
      %p123 = scmp.ne.s32.totalorder %s118, %s120
      %p124 = scmp.eq.s32.totalorder %s21, 0
      %p125 = por %p123, %p124
      %p126 = scmp.ne.s32.totalorder %s118, %s120
      %p127 = scmp.eq.s32.totalorder %s26, 1
      %p128 = por %p126, %p127
      %p129 = scmp.ne.s32.totalorder %s120, %s121
      %p130 = scmp.eq.s32.totalorder %s26, 0
      %p131 = por %p129, %p130
      %p132 = scmp.ne.s32.totalorder %s120, %s121
      %p133 = scmp.eq.s32.totalorder %s27, 1
      %p134 = por %p132, %p133
      %p136 = scmp.ne.s32.totalorder %s121, %s135
      %p137 = scmp.eq.s32.totalorder %s27, 0
      %p138 = por %p136, %p137
      %s140 = sadd.s32 %s139, 1
      %p143 = scmp.eq.s32.totalorder %s21, 1
      %p144 = scmp.ne.s32.totalorder %s139, %s141
      %p145 = scmp.eq.s32.totalorder %s21, 0
      %p146 = por %p144, %p145
      %p147 = scmp.ne.s32.totalorder %s139, %s141
      %p148 = scmp.eq.s32.totalorder %s26, 1
      %p149 = por %p147, %p148
      %p150 = scmp.ne.s32.totalorder %s141, %s142
      %p151 = scmp.eq.s32.totalorder %s26, 0
      %p152 = por %p150, %p151
      %p153 = scmp.ne.s32.totalorder %s141, %s142
      %p154 = scmp.eq.s32.totalorder %s27, 1
      %p155 = por %p153, %p154
      %p157 = scmp.ne.s32.totalorder %s142, %s156
      %p158 = scmp.eq.s32.totalorder %s27, 0
      %p159 = por %p157, %p158
      %s161 = sadd.s32 %s160, 1
      %p164 = scmp.eq.s32.totalorder %s21, 1
      %p165 = scmp.ne.s32.totalorder %s160, %s162
      %p166 = scmp.eq.s32.totalorder %s21, 0
      %p167 = por %p165, %p166
      %p168 = scmp.ne.s32.totalorder %s160, %s162
      %p169 = scmp.eq.s32.totalorder %s26, 1
      %p170 = por %p168, %p169
      %p171 = scmp.ne.s32.totalorder %s162, %s163
      %p172 = scmp.eq.s32.totalorder %s26, 0
      %p173 = por %p171, %p172
      %p174 = scmp.ne.s32.totalorder %s162, %s163
      %p175 = scmp.eq.s32.totalorder %s27, 1
      %p176 = por %p174, %p175
      %p178 = scmp.ne.s32.totalorder %s163, %s177
      %p179 = scmp.eq.s32.totalorder %s27, 0
      %p180 = por %p178, %p179
      %s182 = sadd.s32 %s181, 1
      %p185 = scmp.eq.s32.totalorder %s21, 1
      %p186 = scmp.ne.s32.totalorder %s181, %s183
      %p187 = scmp.eq.s32.totalorder %s21, 0
      %p188 = por %p186, %p187
      %p189 = scmp.ne.s32.totalorder %s181, %s183
      %p190 = scmp.eq.s32.totalorder %s26, 1
      %p191 = por %p189, %p190
      %p192 = scmp.ne.s32.totalorder %s183, %s184
      %p193 = scmp.eq.s32.totalorder %s26, 0
      %p194 = por %p192, %p193
      %p195 = scmp.ne.s32.totalorder %s183, %s184
      %p196 = scmp.eq.s32.totalorder %s27, 1
      %p197 = por %p195, %p196
      %p199 = scmp.ne.s32.totalorder %s184, %s198
      %p200 = scmp.eq.s32.totalorder %s27, 0
      %p201 = por %p199, %p200
      %s203 = sadd.s32 %s202, 1
      %p206 = scmp.eq.s32.totalorder %s21, 1
      %p207 = scmp.ne.s32.totalorder %s202, %s204
      %p208 = scmp.eq.s32.totalorder %s21, 0
      %p209 = por %p207, %p208
      %p210 = scmp.ne.s32.totalorder %s202, %s204
      %p211 = scmp.eq.s32.totalorder %s26, 1
      %p212 = por %p210, %p211
      %p213 = scmp.ne.s32.totalorder %s204, %s205
      %p214 = scmp.eq.s32.totalorder %s26, 0
      %p215 = por %p213, %p214
      %p216 = scmp.ne.s32.totalorder %s204, %s205
      %p217 = scmp.eq.s32.totalorder %s27, 1
      %p218 = por %p216, %p217
      %p220 = scmp.ne.s32.totalorder %s205, %s219
      %p221 = scmp.eq.s32.totalorder %s27, 0
      %p222 = por %p220, %p221
      %s224 = sadd.s32 %s223, 1
      %p227 = scmp.eq.s32.totalorder %s21, 1
      %p228 = scmp.ne.s32.totalorder %s223, %s225
      %p229 = scmp.eq.s32.totalorder %s21, 0
      %p230 = por %p228, %p229
      %p231 = scmp.ne.s32.totalorder %s223, %s225
      %p232 = scmp.eq.s32.totalorder %s26, 1
      %p233 = por %p231, %p232
      %p234 = scmp.ne.s32.totalorder %s225, %s226
      %p235 = scmp.eq.s32.totalorder %s26, 0
      %p236 = por %p234, %p235
      %p237 = scmp.ne.s32.totalorder %s225, %s226
      %p238 = scmp.eq.s32.totalorder %s27, 1
      %p239 = por %p237, %p238
      %p241 = scmp.ne.s32.totalorder %s226, %s240
      %p242 = scmp.eq.s32.totalorder %s27, 0
      %p243 = por %p241, %p242
      %s244 = ssub.s32 %s21, %s28
      %p245 = scmp.eq.s32.totalorder %s244, 0
      %s247 = sadd.s32 %s246, 1
      %s248 = scalar_select %p245, %s246, %s247
      %p251 = pneg %p245
      %p252 = scmp.eq.s32.totalorder %s21, 1
      %p253 = por %p251, %p252
      %p254 = scmp.ne.s32.totalorder %s246, %s249
      %p255 = scmp.eq.s32.totalorder %s21, 0
      %p256 = por %p254, %p255
      %p257 = scmp.ne.s32.totalorder %s246, %s249
      %p258 = scmp.eq.s32.totalorder %s26, 1
      %p259 = por %p257, %p258
      %p260 = scmp.ne.s32.totalorder %s249, %s250
      %p261 = scmp.eq.s32.totalorder %s26, 0
      %p262 = por %p260, %p261
      %p263 = scmp.ne.s32.totalorder %s249, %s250
      %p264 = scmp.eq.s32.totalorder %s27, 1
      %p265 = por %p263, %p264
      %p267 = scmp.ne.s32.totalorder %s250, %s266
      %p268 = scmp.eq.s32.totalorder %s27, 0
      %p269 = por %p267, %p268
      %p270 = scmp.le.s32.totalorder 1, %s21
      %p271 = scmp.lt.s32.totalorder %s21, 3
      %p272 = pnand %p270, %p271
      %p273 = pneg %p272
      // Predicated region
      $region9: #{tpu_custom_call.1} parent=5 // pred_check
        _
      $region10: #{tpu_custom_call.1} parent=5 // pred_check_branch
        %275 = sbr.rel (%p272) target = $region12
      $region11: #{tpu_custom_call.1} parent=5 // pred_region
        %s276 = ssub.s32 %s21, 1
        // Predicated region
        $region13: #{tpu_custom_call.1} parent=11 // pred_check
          %p277 = pneg %p68
        $region14: #{tpu_custom_call.1} parent=11 // pred_check_branch
          %279 = sbr.rel (%p277) target = $region16
        $region15: #{tpu_custom_call.1} parent=11 // pred_region
          _
        $region16: #{tpu_custom_call.1} parent=11 // pred_fallthru
          _
        // Predicated region
        $region17: #{tpu_custom_call.1} parent=11 // pred_check
          %p280 = pneg %p89
        $region18: #{tpu_custom_call.1} parent=11 // pred_check_branch
          %282 = sbr.rel (%p280) target = $region20
        $region19: #{tpu_custom_call.1} parent=11 // pred_region
          %s284 = ssub.s32 16, 16
          %285 = vsyncadd [#allocation5], %s284
          %s287 = sshll.u32 %s2, 4
          %s288 = int_to_ptr.vmem [resolvable:$true] %s287
          %290 = dma.vmem_to_smem %s288, 16, [#allocation3], [#allocation5]
        $region20: #{tpu_custom_call.1} parent=11 // pred_fallthru
          _
        // Predicated region
        $region21: #{tpu_custom_call.1} parent=11 // pred_check
          %p291 = pneg %p110
        $region22: #{tpu_custom_call.1} parent=11 // pred_check_branch
          %293 = sbr.rel (%p291) target = $region24
        $region23: #{tpu_custom_call.1} parent=11 // pred_region
          _
        $region24: #{tpu_custom_call.1} parent=11 // pred_fallthru
          _
        // Predicated region
        $region25: #{tpu_custom_call.1} parent=11 // pred_check
          %p294 = pneg %p131
        $region26: #{tpu_custom_call.1} parent=11 // pred_check_branch
          %296 = sbr.rel (%p294) target = $region28
        $region27: #{tpu_custom_call.1} parent=11 // pred_region
          _
        $region28: #{tpu_custom_call.1} parent=11 // pred_fallthru
          _
        // Predicated region
        $region29: #{tpu_custom_call.1} parent=11 // pred_check
          %p297 = pneg %p152
        $region30: #{tpu_custom_call.1} parent=11 // pred_check_branch
          %299 = sbr.rel (%p297) target = $region32
        $region31: #{tpu_custom_call.1} parent=11 // pred_region
          _
        $region32: #{tpu_custom_call.1} parent=11 // pred_fallthru
          _
        // Predicated region
        $region33: #{tpu_custom_call.1} parent=11 // pred_check
          %p300 = pneg %p173
        $region34: #{tpu_custom_call.1} parent=11 // pred_check_branch
          %302 = sbr.rel (%p300) target = $region36
        $region35: #{tpu_custom_call.1} parent=11 // pred_region
          _
        $region36: #{tpu_custom_call.1} parent=11 // pred_fallthru
          _
        // Predicated region
        $region37: #{tpu_custom_call.1} parent=11 // pred_check
          %p303 = pneg %p194
        $region38: #{tpu_custom_call.1} parent=11 // pred_check_branch
          %305 = sbr.rel (%p303) target = $region40
        $region39: #{tpu_custom_call.1} parent=11 // pred_region
          _
        $region40: #{tpu_custom_call.1} parent=11 // pred_fallthru
          _
        // Predicated region
        $region41: #{tpu_custom_call.1} parent=11 // pred_check
          %p306 = pneg %p215
        $region42: #{tpu_custom_call.1} parent=11 // pred_check_branch
          %308 = sbr.rel (%p306) target = $region44
        $region43: #{tpu_custom_call.1} parent=11 // pred_region
          _
        $region44: #{tpu_custom_call.1} parent=11 // pred_fallthru
          _
        // Predicated region
        $region45: #{tpu_custom_call.1} parent=11 // pred_check
          %p309 = pneg %p236
        $region46: #{tpu_custom_call.1} parent=11 // pred_check_branch
          %311 = sbr.rel (%p309) target = $region48
        $region47: #{tpu_custom_call.1} parent=11 // pred_region
          _
        $region48: #{tpu_custom_call.1} parent=11 // pred_fallthru
          _
      $region12: #{tpu_custom_call.1} parent=5 // pred_fallthru
        _
      %p312 = scmp.lt.s32.totalorder %s21, 2
      // Predicated region
      $region49: #{tpu_custom_call.1} parent=5 // pred_check
        %p313 = pneg %p312
      $region50: #{tpu_custom_call.1} parent=5 // pred_check_branch
        %315 = sbr.rel (%p313) target = $region52
      $region51: #{tpu_custom_call.1} parent=5 // pred_region
        // Predicated region
        $region53: #{tpu_custom_call.1} parent=51 // pred_check
          %p316 = pneg %p41
        $region54: #{tpu_custom_call.1} parent=51 // pred_check_branch
          %318 = sbr.rel (%p316) target = $region56
        $region55: #{tpu_custom_call.1} parent=51 // pred_region
          %p319 = scmp.lt.s32.totalorder %s21, 1
          %s320 = scalar_select %p319, %s21, 1
          %s321 = smul.addr %s320, 8
          %s322 = smul.addr %s321, 8
          %s323 = scalar_lea.vmem %s0, %s322
        $region56: #{tpu_custom_call.1} parent=51 // pred_fallthru
          _
      $region52: #{tpu_custom_call.1} parent=5 // pred_fallthru
        _
      %p324 = scmp.le.s32.totalorder 1, %s21
      %p325 = scmp.lt.s32.totalorder %s21, 3
      %p326 = pnand %p324, %p325
      %p327 = pneg %p326
      // Predicated region
      $region57: #{tpu_custom_call.1} parent=5 // pred_check
        _
      $region58: #{tpu_custom_call.1} parent=5 // pred_check_branch
        %329 = sbr.rel (%p326) target = $region60
      $region59: #{tpu_custom_call.1} parent=5 // pred_region
        %s330 = ssub.s32 %s21, 1
        // Predicated region
        $region61: #{tpu_custom_call.1} parent=59 // pred_check
          %p331 = pneg %p89
        $region62: #{tpu_custom_call.1} parent=59 // pred_check_branch
          %333 = sbr.rel (%p331) target = $region64
        $region63: #{tpu_custom_call.1} parent=59 // pred_region
          %334 = dma.done [#allocation5], 16
        $region64: #{tpu_custom_call.1} parent=59 // pred_fallthru
          _
        %335 = sfence
        %p336 = scmp.lt.s32.totalorder %s26, 1
        %s337 = scalar_select %p336, %s26, 1
        %s338 = smul.addr %s337, 8
        %s339 = smul.addr %s338, 8
        %s340 = scalar_lea.vmem %s0, %s339
        %p341 = pneg %p47
        %p342 = pneg %p44
        %p343 = pneg %p68
        %p344 = pneg %p65
        %p345 = pneg %p89
        %p346 = pneg %p86
        %p347 = pneg %p110
        %p348 = pneg %p107
        %p349 = pneg %p131
        %p350 = pneg %p128
        %p351 = pneg %p152
        %p352 = pneg %p149
        %p353 = pneg %p173
        %p354 = pneg %p170
        %p355 = pneg %p194
        %p356 = pneg %p191
        %p357 = pneg %p215
        %p358 = pneg %p212
        %p359 = pneg %p236
        %p360 = pneg %p233
        %p361 = pneg %p262
        %p362 = pneg %p259
        %s363 = sand.u32 %s249, 1
        %s364 = scalar_lea.sflag [#allocation4], %s363
        %s365 = sand.u32 %s249, 1
        %s366 = smul.addr %s365, 64
        %s367 = scalar_lea.vmem [#allocation6], %s366
        %p368 = scmp.lt.s32.totalorder %s26, 1
        %s369 = scalar_select %p368, %s26, 1
        %s370 = smul.addr %s369, 8
        %s371 = smul.addr %s370, 8
        %s372 = scalar_lea.vmem %s0, %s371
        %v373 = vld [vmem:[%s372] sm:$0xff]
        %v374 = vld [vmem:[%s372 + $0x8] sm:$0xff]
        %v375 = vld [vmem:[%s372 + $0x10] sm:$0xff]
        %v376 = vld [vmem:[%s372 + $0x18] sm:$0xff]
        %v377 = vld [vmem:[%s372 + $0x20] sm:$0xff]
        %v378 = vld [vmem:[%s372 + $0x28] sm:$0xff]
        %v379 = vld [vmem:[%s372 + $0x30] sm:$0xff]
        %v380 = vld [vmem:[%s372 + $0x38] sm:$0xff]
        %v381 = vadd.f32 %v373, %v374
        %382 = vadd.xlane.f32.xlu0 %v381
        %v383 = vpop.xlane.xlu0 %382
        %v384 = vadd.f32 %v375, %v376
        %385 = vadd.xlane.f32.xlu0 %v384
        %v386 = vpop.xlane.xlu0 %385
        %v387 = vadd.f32 %v377, %v378
        %388 = vadd.xlane.f32.xlu0 %v387
        %v389 = vpop.xlane.xlu0 %388
        %v390 = vadd.f32 %v379, %v380
        %391 = vadd.xlane.f32.xlu0 %v390
        %v392 = vpop.xlane.xlu0 %391
        %v393 = vrcp.pop 256.0
        %v394 = vmul.f32 %v383, %v393
        %v395 = vmul.f32 %v386, %v393
        %v396 = vmul.f32 %v389, %v393
        %v397 = vmul.f32 %v392, %v393
        %v398 = vld [vmem:[%s4] sm:$0xff]
        %v399 = vld [vmem:[%s4 + $0x8] sm:$0xff]
        %v400 = vld [vmem:[%s4 + $0x10] sm:$0xff]
        %v401 = vld [vmem:[%s4 + $0x18] sm:$0xff]
        %v402 = vld [vmem:[%s1] sm:$0xff]
        %v403 = vld [vmem:[%s1 + $0x8] sm:$0xff]
        %v404 = vld [vmem:[%s1 + $0x10] sm:$0xff]
        %v405 = vld [vmem:[%s1 + $0x18] sm:$0xff]
        %v406 = vmul.f32 %v394, %v402
        %v407 = vmul.f32 %v395, %v403
        %v408 = vmul.f32 %v396, %v404
        %v409 = vmul.f32 %v397, %v405
        %vm410 = vcmask 7168
        %v411 = vsel %vm410, %v406, 0.0
        %v412 = vsel %vm410, %v407, 0.0
        %v413 = vadd.f32 %v411, %v412
        %v414 = vsel %vm410, %v408, 0.0
        %v415 = vadd.f32 %v413, %v414
        %v416 = vsel %vm410, %v409, 0.0
        %v417 = vadd.f32 %v415, %v416
        %v418 = vrot.slane %v417, 4
        %v419 = vadd.f32 %v417, %v418
        %v420 = vrot.slane %v419, 2
        %v421 = vadd.f32 %v419, %v420
        %v422 = vrot.slane %v421, 1
        %v423 = vadd.f32 %v421, %v422
        %s424 = sld [smem:[#allocation3]]
        %v425 = vstv %s424
        %v426 = vadd.f32 %v423, %v425
        %v427 = vmax.f32 %v426, 0.0
        %v428 = vld [vmem:[%s3] sm:$0xff]
        %v429 = vld [vmem:[%s3 + $0x8] sm:$0xff]
        %v430 = vld [vmem:[%s3 + $0x10] sm:$0xff]
        %v431 = vld [vmem:[%s3 + $0x18] sm:$0xff]
        %v432 = vmul.f32 %v427, %v428
        %v433 = vmul.f32 %v427, %v429
        %v434 = vmul.f32 %v427, %v430
        %v435 = vmul.f32 %v427, %v431
        %v436 = vadd.f32 %v398, %v432
        %v437 = vadd.f32 %v399, %v433
        %v438 = vadd.f32 %v400, %v434
        %v439 = vadd.f32 %v401, %v435
        %s440 = scalar_lea.vmem %s1, 32
        %v441 = vld [vmem:[%s440] sm:$0xff]
        %v442 = vld [vmem:[%s440 + $0x8] sm:$0xff]
        %v443 = vld [vmem:[%s440 + $0x10] sm:$0xff]
        %v444 = vld [vmem:[%s440 + $0x18] sm:$0xff]
        %v445 = vmul.f32 %v394, %v441
        %v446 = vmul.f32 %v395, %v442
        %v447 = vmul.f32 %v396, %v443
        %v448 = vmul.f32 %v397, %v444
        %v449 = vsel %vm410, %v445, 0.0
        %v450 = vsel %vm410, %v446, 0.0
        %v451 = vadd.f32 %v449, %v450
        %v452 = vsel %vm410, %v447, 0.0
        %v453 = vadd.f32 %v451, %v452
        %v454 = vsel %vm410, %v448, 0.0
        %v455 = vadd.f32 %v453, %v454
        %v456 = vrot.slane %v455, 4
        %v457 = vadd.f32 %v455, %v456
        %v458 = vrot.slane %v457, 2
        %v459 = vadd.f32 %v457, %v458
        %v460 = vrot.slane %v459, 1
        %v461 = vadd.f32 %v459, %v460
        %s462 = sld [smem:[#allocation3 + $0x1]]
        %v463 = vstv %s462
        %v464 = vadd.f32 %v461, %v463
        %v465 = vmax.f32 %v464, 0.0
        %s466 = scalar_lea.vmem %s3, 32
        %v467 = vld [vmem:[%s466] sm:$0xff]
        %v468 = vld [vmem:[%s466 + $0x8] sm:$0xff]
        %v469 = vld [vmem:[%s466 + $0x10] sm:$0xff]
        %v470 = vld [vmem:[%s466 + $0x18] sm:$0xff]
        %v471 = vmul.f32 %v465, %v467
        %v472 = vmul.f32 %v465, %v468
        %v473 = vmul.f32 %v465, %v469
        %v474 = vmul.f32 %v465, %v470
        %v475 = vadd.f32 %v436, %v471
        %v476 = vadd.f32 %v437, %v472
        %v477 = vadd.f32 %v438, %v473
        %v478 = vadd.f32 %v439, %v474
        %s479 = scalar_lea.vmem %s1, 64
        %v480 = vld [vmem:[%s479] sm:$0xff]
        %v481 = vld [vmem:[%s479 + $0x8] sm:$0xff]
        %v482 = vld [vmem:[%s479 + $0x10] sm:$0xff]
        %v483 = vld [vmem:[%s479 + $0x18] sm:$0xff]
        %v484 = vmul.f32 %v394, %v480
        %v485 = vmul.f32 %v395, %v481
        %v486 = vmul.f32 %v396, %v482
        %v487 = vmul.f32 %v397, %v483
        %v488 = vsel %vm410, %v484, 0.0
        %v489 = vsel %vm410, %v485, 0.0
        %v490 = vadd.f32 %v488, %v489
        %v491 = vsel %vm410, %v486, 0.0
        %v492 = vadd.f32 %v490, %v491
        %v493 = vsel %vm410, %v487, 0.0
        %v494 = vadd.f32 %v492, %v493
        %v495 = vrot.slane %v494, 4
        %v496 = vadd.f32 %v494, %v495
        %v497 = vrot.slane %v496, 2
        %v498 = vadd.f32 %v496, %v497
        %v499 = vrot.slane %v498, 1
        %v500 = vadd.f32 %v498, %v499
        %s501 = sld [smem:[#allocation3 + $0x2]]
        %v502 = vstv %s501
        %v503 = vadd.f32 %v500, %v502
        %v504 = vmax.f32 %v503, 0.0
        %s505 = scalar_lea.vmem %s3, 64
        %v506 = vld [vmem:[%s505] sm:$0xff]
        %v507 = vld [vmem:[%s505 + $0x8] sm:$0xff]
        %v508 = vld [vmem:[%s505 + $0x10] sm:$0xff]
        %v509 = vld [vmem:[%s505 + $0x18] sm:$0xff]
        %v510 = vmul.f32 %v504, %v506
        %v511 = vmul.f32 %v504, %v507
        %v512 = vmul.f32 %v504, %v508
        %v513 = vmul.f32 %v504, %v509
        %v514 = vadd.f32 %v475, %v510
        %v515 = vadd.f32 %v476, %v511
        %v516 = vadd.f32 %v477, %v512
        %v517 = vadd.f32 %v478, %v513
        %s518 = scalar_lea.vmem %s1, 96
        %v519 = vld [vmem:[%s518] sm:$0xff]
        %v520 = vld [vmem:[%s518 + $0x8] sm:$0xff]
        %v521 = vld [vmem:[%s518 + $0x10] sm:$0xff]
        %v522 = vld [vmem:[%s518 + $0x18] sm:$0xff]
        %v523 = vmul.f32 %v394, %v519
        %v524 = vmul.f32 %v395, %v520
        %v525 = vmul.f32 %v396, %v521
        %v526 = vmul.f32 %v397, %v522
        %v527 = vsel %vm410, %v523, 0.0
        %v528 = vsel %vm410, %v524, 0.0
        %v529 = vadd.f32 %v527, %v528
        %v530 = vsel %vm410, %v525, 0.0
        %v531 = vadd.f32 %v529, %v530
        %v532 = vsel %vm410, %v526, 0.0
        %v533 = vadd.f32 %v531, %v532
        %v534 = vrot.slane %v533, 4
        %v535 = vadd.f32 %v533, %v534
        %v536 = vrot.slane %v535, 2
        %v537 = vadd.f32 %v535, %v536
        %v538 = vrot.slane %v537, 1
        %v539 = vadd.f32 %v537, %v538
        %s540 = sld [smem:[#allocation3 + $0x3]]
        %v541 = vstv %s540
        %v542 = vadd.f32 %v539, %v541
        %v543 = vmax.f32 %v542, 0.0
        %s544 = scalar_lea.vmem %s3, 96
        %v545 = vld [vmem:[%s544] sm:$0xff]
        %v546 = vld [vmem:[%s544 + $0x8] sm:$0xff]
        %v547 = vld [vmem:[%s544 + $0x10] sm:$0xff]
        %v548 = vld [vmem:[%s544 + $0x18] sm:$0xff]
        %v549 = vmul.f32 %v543, %v545
        %v550 = vmul.f32 %v543, %v546
        %v551 = vmul.f32 %v543, %v547
        %v552 = vmul.f32 %v543, %v548
        %v553 = vadd.f32 %v514, %v549
        %v554 = vadd.f32 %v515, %v550
        %v555 = vadd.f32 %v516, %v551
        %v556 = vadd.f32 %v517, %v552
        %v557 = vsel %vm410, %v553, -inf
        %v558 = vsel %vm410, %v554, -inf
        %v559 = vsel %vm410, %v555, -inf
        %v560 = vsel %vm410, %v556, -inf
        %v561 = vmax.f32 %v557, %v558
        %v562 = vmax.f32 %v559, %v560
        %v563 = vmax.f32 %v561, %v562
        %v564 = vrot.slane %v563, 4
        %v565 = vmax.f32 %v563, %v564
        %v566 = vrot.slane %v565, 2
        %v567 = vmax.f32 %v565, %v566
        %v568 = vrot.slane %v567, 1
        %v569 = vmax.f32 %v567, %v568
        %v570 = vsub.f32 %v553, %v569
        %v571 = vsub.f32 %v554, %v569
        %v572 = vsub.f32 %v555, %v569
        %v573 = vsub.f32 %v556, %v569
        %v574 = vmul.f32 %v570, 1.442695
        %v575 = vpow.pop %v574
        %v576 = vmul.f32 %v571, 1.442695
        %v577 = vpow.pop %v576
        %v578 = vmul.f32 %v572, 1.442695
        %v579 = vpow.pop %v578
        %v580 = vmul.f32 %v573, 1.442695
        %v581 = vpow.pop %v580
        %v582 = vsel %vm410, %v575, 0.0
        %v583 = vsel %vm410, %v577, 0.0
        %v584 = vadd.f32 %v582, %v583
        %v585 = vsel %vm410, %v579, 0.0
        %v586 = vadd.f32 %v584, %v585
        %v587 = vsel %vm410, %v581, 0.0
        %v588 = vadd.f32 %v586, %v587
        %v589 = vrot.slane %v588, 4
        %v590 = vadd.f32 %v588, %v589
        %v591 = vrot.slane %v590, 2
        %v592 = vadd.f32 %v590, %v591
        %v593 = vrot.slane %v592, 1
        %v594 = vadd.f32 %v592, %v593
        %v595 = vrcp.pop %v594
        %v596 = vmul.f32 %v575, %v595
        %v597 = vmul.f32 %v577, %v595
        %v598 = vmul.f32 %v579, %v595
        %v599 = vmul.f32 %v581, %v595
        %601 = vset.pattern.permute.xlu0 0
        %602 = vperm.xlu0 %601, %v596
        %v603 = vpop.permute.xlu0 %602
        %606 = vset.pattern.permute.xlu0 0
        %607 = vperm.xlu0 %606, %v597
        %v608 = vpop.permute.xlu0 %607
        %611 = vset.pattern.permute.xlu0 0
        %612 = vperm.xlu0 %611, %v598
        %v613 = vpop.permute.xlu0 %612
        %616 = vset.pattern.permute.xlu0 0
        %617 = vperm.xlu0 %616, %v599
        %v618 = vpop.permute.xlu0 %617
        %v620 = vmul.f32 %v373, %v603
        %v621 = vmul.f32 %v374, %v603
        %v622 = vmul.f32 %v375, %v608
        %v623 = vmul.f32 %v376, %v608
        %v624 = vmul.f32 %v377, %v613
        %v625 = vmul.f32 %v378, %v613
        %v626 = vmul.f32 %v379, %v618
        %v627 = vmul.f32 %v380, %v618
        %v628 = vld [vmem:[%s5] sm:$0x3]
        %v629 = vld [vmem:[%s6] sm:$0x3]
        %631 = vset.pattern.permute.xlu0 0
        %632 = vperm.xlu0 %631, %v629
        %v633 = vpop.permute.xlu0 %632
        %vm635 = vcmask 261120
        %v637 = vsel %vm635, %v628, 0
        %639 = vmatprep.subr.mxu0 0.0
        %640 = vmatpush1.msra.mxu0 0.0
        %641 = vmatprep.subr.mxu0 0.0
        %642 = vmatpush1.msra.mxu0 0.0
        %643 = vmatprep.subr.mxu0 0.0
        %644 = vmatpush1.msra.mxu0 0.0
        %645 = vmatprep.subr.mxu0 0.0
        %646 = vmatpush1.msra.mxu0 0.0
        %647 = vmatprep.subr.mxu0 0.0
        %648 = vmatpush1.msra.mxu0 0.0
        %649 = vmatprep.subr.mxu0 0.0
        %650 = vmatpush1.msra.mxu0 0.0
        %651 = vmatprep.subr.mxu0 0.0
        %652 = vmatpush1.msra.mxu0 0.0
        %653 = vmatprep.subr.mxu0 0.0
        %654 = vmatpush1.msra.mxu0 0.0
        %655 = vmatprep.subr.mxu0 0.0
        %656 = vmatpush1.msra.mxu0 0.0
        %657 = vmatprep.subr.mxu0 0.0
        %658 = vmatpush1.msra.mxu0 0.0
        %659 = vmatprep.subr.mxu0 0.0
        %660 = vmatpush1.msra.mxu0 0.0
        %661 = vmatprep.subr.mxu0 0.0
        %662 = vmatpush1.msra.mxu0 0.0
        %663 = vmatprep.subr.mxu0 %v627
        %664 = vmatpush1.msra.mxu0 %v626
        %665 = vmatprep.subr.mxu0 %v625
        %666 = vmatpush1.msra.mxu0 %v624
        %667 = vmatprep.subr.mxu0 %v623
        %668 = vmatpush1.msra.mxu0 %v622
        %669 = vmatprep.subr.mxu0 %v621
        %670 = vmatpush1.msra.mxu0 %v620
        %671 = vmatprep.subr.mxu0 0.0
        %672 = vmatpush2.msra.mxu0 0.0
        %673 = vmatprep.subr.mxu0 0.0
        %674 = vmatpush2.msra.mxu0 0.0
        %675 = vmatprep.subr.mxu0 0.0
        %676 = vmatpush2.msra.mxu0 0.0
        %677 = vmatprep.subr.mxu0 0.0
        %678 = vmatpush2.msra.mxu0 0.0
        %679 = vmatprep.subr.mxu0 0.0
        %680 = vmatpush2.msra.mxu0 0.0
        %681 = vmatprep.subr.mxu0 0.0
        %682 = vmatpush2.msra.mxu0 0.0
        %683 = vmatprep.subr.mxu0 0.0
        %684 = vmatpush2.msra.mxu0 0.0
        %685 = vmatprep.subr.mxu0 0.0
        %686 = vmatpush2.msra.mxu0 0.0
        %687 = vmatprep.subr.mxu0 0.0
        %688 = vmatpush2.msra.mxu0 0.0
        %689 = vmatprep.subr.mxu0 0.0
        %690 = vmatpush2.msra.mxu0 0.0
        %691 = vmatprep.subr.mxu0 0.0
        %692 = vmatpush2.msra.mxu0 0.0
        %693 = vmatprep.subr.mxu0 0.0
        %694 = vmatpush2.msra.mxu0 0.0
        %695 = vmatprep.subr.mxu0 0.0
        %696 = vmatpush2.msra.mxu0 0.0
        %697 = vmatprep.subr.mxu0 0.0
        %698 = vmatpush2.msra.mxu0 0.0
        %699 = vmatprep.subr.mxu0 0.0
        %700 = vmatpush2.msra.mxu0 0.0
        %701 = vmatprep.subr.mxu0 0.0
        %702 = vmatpush2.msra.mxu0 0.0
        %703 = vmatprep.mubr.f32.mxu0 0.0
        %704 = vmatmul.mubr.f32.gmra.mxu0 %v637
        %v705 = vpop.f32.mrf.mxu0
        %v706 = vadd.f32 %v633, %v705
        %v707 = vpop.f32.mrf.mxu0
        %v708 = vadd.f32 %v633, %v707
        %709 = vdwg.mxu0
        %v710 = vmax.f32 %v706, 0.0
        %v711 = vmax.f32 %v708, 0.0
        %s712 = scalar_lea.vmem %s7, 8
        %v713 = vld [vmem:[%s712] sm:$0x3]
        %715 = vset.pattern.permute.xlu0 0
        %716 = vperm.xlu0 %715, %v713
        %v717 = vpop.permute.xlu0 %716
        %v719 = vmul.f32 %v710, %v717
        %v720 = vmul.f32 %v711, %v717
        %vm721 = vcmask 1041408
        %v722 = vsel %vm721, %v719, 0.0
        %v723 = vrot.slane %v722, 4
        %v724 = vadd.f32 %v722, %v723
        %v725 = vrot.slane %v724, 2
        %v726 = vadd.f32 %v724, %v725
        %v727 = vrot.slane %v726, 1
        %v728 = vadd.f32 %v726, %v727
        %v729 = vsel %vm721, %v720, 0.0
        %v730 = vrot.slane %v729, 4
        %v731 = vadd.f32 %v729, %v730
        %v732 = vrot.slane %v731, 2
        %v733 = vadd.f32 %v731, %v732
        %v734 = vrot.slane %v733, 1
        %v735 = vadd.f32 %v733, %v734
        %s736 = sld [smem:[#allocation2]]
        %v737 = vstv %s736
        %v738 = vadd.f32 %v728, %v737
        %v739 = vadd.f32 %v735, %v737
        %v740 = vld [vmem:[%s7] sm:$0x3]
        %742 = vset.pattern.permute.xlu0 0
        %743 = vperm.xlu0 %742, %v740
        %v744 = vpop.permute.xlu0 %743
        %v746 = vmul.f32 %v710, %v744
        %v747 = vmul.f32 %v711, %v744
        %v748 = vsel %vm721, %v746, 0.0
        %v749 = vrot.slane %v748, 4
        %v750 = vadd.f32 %v748, %v749
        %v751 = vrot.slane %v750, 2
        %v752 = vadd.f32 %v750, %v751
        %v753 = vrot.slane %v752, 1
        %v754 = vadd.f32 %v752, %v753
        %v755 = vsel %vm721, %v747, 0.0
        %v756 = vrot.slane %v755, 4
        %v757 = vadd.f32 %v755, %v756
        %v758 = vrot.slane %v757, 2
        %v759 = vadd.f32 %v757, %v758
        %v760 = vrot.slane %v759, 1
        %v761 = vadd.f32 %v759, %v760
        %762 = vrot.lane.b32.xlu0 %v754, 17
        %v763 = vpop.permute.xlu0 %762
        %764 = vrot.lane.b32.xlu0 %v761, 17
        %v765 = vpop.permute.xlu0 %764
        %v766 = vlaneseq
        %v767 = vand.u32 %v766, 127
        %vm768 = vcmp.lt.s32.totalorder %v767, 17
        %v769 = vsel %vm768, %v763, %v765
        %v770 = vsel %vm768, %v765, %v763
        %v771 = vld [vmem:[%s9] sm:$0x3]
        %v773 = vlaneseq
        %v774 = vshrl.u32 %v773, 7
        %v775 = vsub.s32 0, %v774
        %v776 = vrot.slane %v771, %v775
        %v777 = vlaneseq
        %v778 = vshrl.u32 %v777, 7
        %v779 = vsub.s32 1, %v778
        %v780 = vrot.slane %v771, %v779
        %v783 = vmul.f32 %v770, %v776
        %v784 = vmul.f32 %v769, %v780
        %v785 = vadd.f32 %v738, %v783
        %v786 = vadd.f32 %v739, %v784
        %s787 = scalar_lea.vmem %s7, 2
        %v788 = vld [vmem:[%s787] sm:$0x3]
        %790 = vset.pattern.permute.xlu0 0
        %791 = vperm.xlu0 %790, %v788
        %v792 = vpop.permute.xlu0 %791
        %v794 = vmul.f32 %v710, %v792
        %v795 = vmul.f32 %v711, %v792
        %v796 = vsel %vm721, %v794, 0.0
        %v797 = vrot.slane %v796, 4
        %v798 = vadd.f32 %v796, %v797
        %v799 = vrot.slane %v798, 2
        %v800 = vadd.f32 %v798, %v799
        %v801 = vrot.slane %v800, 1
        %v802 = vadd.f32 %v800, %v801
        %v803 = vsel %vm721, %v795, 0.0
        %v804 = vrot.slane %v803, 4
        %v805 = vadd.f32 %v803, %v804
        %v806 = vrot.slane %v805, 2
        %v807 = vadd.f32 %v805, %v806
        %v808 = vrot.slane %v807, 1
        %v809 = vadd.f32 %v807, %v808
        %810 = vrot.lane.b32.xlu0 %v802, 16
        %v811 = vpop.permute.xlu0 %810
        %812 = vrot.lane.b32.xlu0 %v809, 16
        %v813 = vpop.permute.xlu0 %812
        %vm814 = vcmp.lt.s32.totalorder %v767, 16
        %v815 = vsel %vm814, %v811, %v813
        %v816 = vsel %vm814, %v813, %v811
        %s817 = scalar_lea.vmem %s9, 2
        %v818 = vld [vmem:[%s817] sm:$0x3]
        %v820 = vlaneseq
        %v821 = vshrl.u32 %v820, 7
        %v822 = vsub.s32 0, %v821
        %v823 = vrot.slane %v818, %v822
        %v824 = vlaneseq
        %v825 = vshrl.u32 %v824, 7
        %v826 = vsub.s32 1, %v825
        %v827 = vrot.slane %v818, %v826
        %v830 = vmul.f32 %v816, %v823
        %v831 = vmul.f32 %v815, %v827
        %v832 = vadd.f32 %v785, %v830
        %v833 = vadd.f32 %v786, %v831
        %s834 = scalar_lea.vmem %s7, 4
        %v835 = vld [vmem:[%s834] sm:$0x3]
        %837 = vset.pattern.permute.xlu0 0
        %838 = vperm.xlu0 %837, %v835
        %v839 = vpop.permute.xlu0 %838
        %v841 = vmul.f32 %v710, %v839
        %v842 = vmul.f32 %v711, %v839
        %v843 = vsel %vm721, %v841, 0.0
        %v844 = vrot.slane %v843, 4
        %v845 = vadd.f32 %v843, %v844
        %v846 = vrot.slane %v845, 2
        %v847 = vadd.f32 %v845, %v846
        %v848 = vrot.slane %v847, 1
        %v849 = vadd.f32 %v847, %v848
        %v850 = vsel %vm721, %v842, 0.0
        %v851 = vrot.slane %v850, 4
        %v852 = vadd.f32 %v850, %v851
        %v853 = vrot.slane %v852, 2
        %v854 = vadd.f32 %v852, %v853
        %v855 = vrot.slane %v854, 1
        %v856 = vadd.f32 %v854, %v855
        %857 = vrot.lane.b32.xlu0 %v849, 15
        %v858 = vpop.permute.xlu0 %857
        %859 = vrot.lane.b32.xlu0 %v856, 15
        %v860 = vpop.permute.xlu0 %859
        %vm861 = vcmp.lt.s32.totalorder %v767, 15
        %v862 = vsel %vm861, %v858, %v860
        %v863 = vsel %vm861, %v860, %v858
        %s864 = scalar_lea.vmem %s9, 4
        %v865 = vld [vmem:[%s864] sm:$0x3]
        %v867 = vlaneseq
        %v868 = vshrl.u32 %v867, 7
        %v869 = vsub.s32 0, %v868
        %v870 = vrot.slane %v865, %v869
        %v871 = vlaneseq
        %v872 = vshrl.u32 %v871, 7
        %v873 = vsub.s32 1, %v872
        %v874 = vrot.slane %v865, %v873
        %v877 = vmul.f32 %v863, %v870
        %v878 = vmul.f32 %v862, %v874
        %v879 = vadd.f32 %v832, %v877
        %v880 = vadd.f32 %v833, %v878
        %s881 = scalar_lea.vmem %s7, 6
        %v882 = vld [vmem:[%s881] sm:$0x3]
        %884 = vset.pattern.permute.xlu0 0
        %885 = vperm.xlu0 %884, %v882
        %v886 = vpop.permute.xlu0 %885
        %v888 = vmul.f32 %v710, %v886
        %v889 = vmul.f32 %v711, %v886
        %v890 = vsel %vm721, %v888, 0.0
        %v891 = vrot.slane %v890, 4
        %v892 = vadd.f32 %v890, %v891
        %v893 = vrot.slane %v892, 2
        %v894 = vadd.f32 %v892, %v893
        %v895 = vrot.slane %v894, 1
        %v896 = vadd.f32 %v894, %v895
        %v897 = vsel %vm721, %v889, 0.0
        %v898 = vrot.slane %v897, 4
        %v899 = vadd.f32 %v897, %v898
        %v900 = vrot.slane %v899, 2
        %v901 = vadd.f32 %v899, %v900
        %v902 = vrot.slane %v901, 1
        %v903 = vadd.f32 %v901, %v902
        %904 = vrot.lane.b32.xlu0 %v896, 1
        %v905 = vpop.permute.xlu0 %904
        %906 = vrot.lane.b32.xlu0 %v903, 1
        %v907 = vpop.permute.xlu0 %906
        %vm908 = vcmp.lt.s32.totalorder %v767, 1
        %v909 = vsel %vm908, %v905, %v907
        %v910 = vsel %vm908, %v907, %v905
        %s911 = scalar_lea.vmem %s9, 6
        %v912 = vld [vmem:[%s911] sm:$0x3]
        %v914 = vlaneseq
        %v915 = vshrl.u32 %v914, 7
        %v916 = vsub.s32 0, %v915
        %v917 = vrot.slane %v912, %v916
        %v918 = vlaneseq
        %v919 = vshrl.u32 %v918, 7
        %v920 = vsub.s32 1, %v919
        %v921 = vrot.slane %v912, %v920
        %v924 = vmul.f32 %v910, %v917
        %v925 = vmul.f32 %v909, %v921
        %v926 = vadd.f32 %v879, %v924
        %v927 = vadd.f32 %v880, %v925
        %s928 = scalar_lea.vmem %s7, 10
        %v929 = vld [vmem:[%s928] sm:$0x3]
        %931 = vset.pattern.permute.xlu0 0
        %932 = vperm.xlu0 %931, %v929
        %v933 = vpop.permute.xlu0 %932
        %v935 = vmul.f32 %v710, %v933
        %v936 = vmul.f32 %v711, %v933
        %v937 = vsel %vm721, %v935, 0.0
        %v938 = vrot.slane %v937, 4
        %v939 = vadd.f32 %v937, %v938
        %v940 = vrot.slane %v939, 2
        %v941 = vadd.f32 %v939, %v940
        %v942 = vrot.slane %v941, 1
        %v943 = vadd.f32 %v941, %v942
        %v944 = vsel %vm721, %v936, 0.0
        %v945 = vrot.slane %v944, 4
        %v946 = vadd.f32 %v944, %v945
        %v947 = vrot.slane %v946, 2
        %v948 = vadd.f32 %v946, %v947
        %v949 = vrot.slane %v948, 1
        %v950 = vadd.f32 %v948, %v949
        %951 = vrot.lane.b32.xlu0 %v943, 127
        %v952 = vpop.permute.xlu0 %951
        %953 = vrot.lane.b32.xlu0 %v950, 127
        %v954 = vpop.permute.xlu0 %953
        %vm955 = vcmp.lt.s32.totalorder %v767, 127
        %v956 = vsel %vm955, %v952, %v954
        %v957 = vsel %vm955, %v954, %v952
        %s958 = scalar_lea.vmem %s9, 10
        %v959 = vld [vmem:[%s958] sm:$0x3]
        %v961 = vlaneseq
        %v962 = vshrl.u32 %v961, 7
        %v963 = vsub.s32 0, %v962
        %v964 = vrot.slane %v959, %v963
        %v965 = vlaneseq
        %v966 = vshrl.u32 %v965, 7
        %v967 = vsub.s32 1, %v966
        %v968 = vrot.slane %v959, %v967
        %v971 = vmul.f32 %v956, %v964
        %v972 = vmul.f32 %v957, %v968
        %v973 = vadd.f32 %v926, %v971
        %v974 = vadd.f32 %v927, %v972
        %s975 = scalar_lea.vmem %s7, 12
        %v976 = vld [vmem:[%s975] sm:$0x3]
        %978 = vset.pattern.permute.xlu0 0
        %979 = vperm.xlu0 %978, %v976
        %v980 = vpop.permute.xlu0 %979
        %v982 = vmul.f32 %v710, %v980
        %v983 = vmul.f32 %v711, %v980
        %v984 = vsel %vm721, %v982, 0.0
        %v985 = vrot.slane %v984, 4
        %v986 = vadd.f32 %v984, %v985
        %v987 = vrot.slane %v986, 2
        %v988 = vadd.f32 %v986, %v987
        %v989 = vrot.slane %v988, 1
        %v990 = vadd.f32 %v988, %v989
        %v991 = vsel %vm721, %v983, 0.0
        %v992 = vrot.slane %v991, 4
        %v993 = vadd.f32 %v991, %v992
        %v994 = vrot.slane %v993, 2
        %v995 = vadd.f32 %v993, %v994
        %v996 = vrot.slane %v995, 1
        %v997 = vadd.f32 %v995, %v996
        %998 = vrot.lane.b32.xlu0 %v990, 113
        %v999 = vpop.permute.xlu0 %998
        %1000 = vrot.lane.b32.xlu0 %v997, 113
        %v1001 = vpop.permute.xlu0 %1000
        %vm1002 = vcmp.lt.s32.totalorder %v767, 113
        %v1003 = vsel %vm1002, %v999, %v1001
        %v1004 = vsel %vm1002, %v1001, %v999
        %s1005 = scalar_lea.vmem %s9, 12
        %v1006 = vld [vmem:[%s1005] sm:$0x3]
        %v1008 = vlaneseq
        %v1009 = vshrl.u32 %v1008, 7
        %v1010 = vsub.s32 0, %v1009
        %v1011 = vrot.slane %v1006, %v1010
        %v1012 = vlaneseq
        %v1013 = vshrl.u32 %v1012, 7
        %v1014 = vsub.s32 1, %v1013
        %v1015 = vrot.slane %v1006, %v1014
        %v1018 = vmul.f32 %v1003, %v1011
        %v1019 = vmul.f32 %v1004, %v1015
        %v1020 = vadd.f32 %v973, %v1018
        %v1021 = vadd.f32 %v974, %v1019
        %s1022 = scalar_lea.vmem %s7, 14
        %v1023 = vld [vmem:[%s1022] sm:$0x3]
        %1025 = vset.pattern.permute.xlu0 0
        %1026 = vperm.xlu0 %1025, %v1023
        %v1027 = vpop.permute.xlu0 %1026
        %v1029 = vmul.f32 %v710, %v1027
        %v1030 = vmul.f32 %v711, %v1027
        %v1031 = vsel %vm721, %v1029, 0.0
        %v1032 = vrot.slane %v1031, 4
        %v1033 = vadd.f32 %v1031, %v1032
        %v1034 = vrot.slane %v1033, 2
        %v1035 = vadd.f32 %v1033, %v1034
        %v1036 = vrot.slane %v1035, 1
        %v1037 = vadd.f32 %v1035, %v1036
        %v1038 = vsel %vm721, %v1030, 0.0
        %v1039 = vrot.slane %v1038, 4
        %v1040 = vadd.f32 %v1038, %v1039
        %v1041 = vrot.slane %v1040, 2
        %v1042 = vadd.f32 %v1040, %v1041
        %v1043 = vrot.slane %v1042, 1
        %v1044 = vadd.f32 %v1042, %v1043
        %1045 = vrot.lane.b32.xlu0 %v1037, 112
        %v1046 = vpop.permute.xlu0 %1045
        %1047 = vrot.lane.b32.xlu0 %v1044, 112
        %v1048 = vpop.permute.xlu0 %1047
        %vm1049 = vcmp.lt.s32.totalorder %v767, 112
        %v1050 = vsel %vm1049, %v1046, %v1048
        %v1051 = vsel %vm1049, %v1048, %v1046
        %s1052 = scalar_lea.vmem %s9, 14
        %v1053 = vld [vmem:[%s1052] sm:$0x3]
        %v1055 = vlaneseq
        %v1056 = vshrl.u32 %v1055, 7
        %v1057 = vsub.s32 0, %v1056
        %v1058 = vrot.slane %v1053, %v1057
        %v1059 = vlaneseq
        %v1060 = vshrl.u32 %v1059, 7
        %v1061 = vsub.s32 1, %v1060
        %v1062 = vrot.slane %v1053, %v1061
        %v1065 = vmul.f32 %v1050, %v1058
        %v1066 = vmul.f32 %v1051, %v1062
        %v1067 = vadd.f32 %v1020, %v1065
        %v1068 = vadd.f32 %v1021, %v1066
        %s1069 = scalar_lea.vmem %s7, 16
        %v1070 = vld [vmem:[%s1069] sm:$0x3]
        %1072 = vset.pattern.permute.xlu0 0
        %1073 = vperm.xlu0 %1072, %v1070
        %v1074 = vpop.permute.xlu0 %1073
        %v1076 = vmul.f32 %v710, %v1074
        %v1077 = vmul.f32 %v711, %v1074
        %v1078 = vsel %vm721, %v1076, 0.0
        %v1079 = vrot.slane %v1078, 4
        %v1080 = vadd.f32 %v1078, %v1079
        %v1081 = vrot.slane %v1080, 2
        %v1082 = vadd.f32 %v1080, %v1081
        %v1083 = vrot.slane %v1082, 1
        %v1084 = vadd.f32 %v1082, %v1083
        %v1085 = vsel %vm721, %v1077, 0.0
        %v1086 = vrot.slane %v1085, 4
        %v1087 = vadd.f32 %v1085, %v1086
        %v1088 = vrot.slane %v1087, 2
        %v1089 = vadd.f32 %v1087, %v1088
        %v1090 = vrot.slane %v1089, 1
        %v1091 = vadd.f32 %v1089, %v1090
        %1092 = vrot.lane.b32.xlu0 %v1084, 111
        %v1093 = vpop.permute.xlu0 %1092
        %1094 = vrot.lane.b32.xlu0 %v1091, 111
        %v1095 = vpop.permute.xlu0 %1094
        %vm1096 = vcmp.lt.s32.totalorder %v767, 111
        %v1097 = vsel %vm1096, %v1093, %v1095
        %v1098 = vsel %vm1096, %v1095, %v1093
        %s1099 = scalar_lea.vmem %s9, 16
        %v1100 = vld [vmem:[%s1099] sm:$0x3]
        %v1102 = vlaneseq
        %v1103 = vshrl.u32 %v1102, 7
        %v1104 = vsub.s32 0, %v1103
        %v1105 = vrot.slane %v1100, %v1104
        %v1106 = vlaneseq
        %v1107 = vshrl.u32 %v1106, 7
        %v1108 = vsub.s32 1, %v1107
        %v1109 = vrot.slane %v1100, %v1108
        %v1112 = vmul.f32 %v1097, %v1105
        %v1113 = vmul.f32 %v1098, %v1109
        %v1114 = vadd.f32 %v1067, %v1112
        %v1115 = vadd.f32 %v1068, %v1113
        %v1116 = vxor.u32 %v1114, 2147483648
        %v1117 = vxor.u32 %v1115, 2147483648
        %v1118 = vmul.f32 %v1116, 1.442695
        %v1119 = vpow.pop %v1118
        %v1120 = vmul.f32 %v1117, 1.442695
        %v1121 = vpow.pop %v1120
        %v1122 = vadd.f32 %v1119, 1.0
        %v1123 = vadd.f32 %v1121, 1.0
        %v1124 = vrcp.pop %v1122
        %v1125 = vmul.f32 1.0, %v1124
        %v1126 = vrcp.pop %v1123
        %v1127 = vmul.f32 1.0, %v1126
        %v1128 = vlaneseq
        %v1129 = vshrl.u32 %v1128, 7
        %v1130 = vsub.s32 0, %v1129
        %v1131 = vrot.slane %v1125, %v1130
        %v1132 = vlaneseq
        %v1133 = vshrl.u32 %v1132, 7
        %v1134 = vsub.s32 0, %v1133
        %v1135 = vrot.slane %v1127, %v1134
        %v1136 = vmul.f32 %v620, %v1131
        %v1137 = vmul.f32 %v621, %v1135
        %v1138 = vmul.f32 %v622, %v1131
        %v1139 = vmul.f32 %v623, %v1135
        %v1140 = vmul.f32 %v624, %v1131
        %v1141 = vmul.f32 %v625, %v1135
        %v1142 = vmul.f32 %v626, %v1131
        %v1143 = vmul.f32 %v627, %v1135
        %1144 = vst [vmem:[%s367] sm:$0xff] %v1136
        %1145 = vst [vmem:[%s367 + $0x8] sm:$0xff] %v1137
        %1146 = vst [vmem:[%s367 + $0x10] sm:$0xff] %v1138
        %1147 = vst [vmem:[%s367 + $0x18] sm:$0xff] %v1139
        %1148 = vst [vmem:[%s367 + $0x20] sm:$0xff] %v1140
        %1149 = vst [vmem:[%s367 + $0x28] sm:$0xff] %v1141
        %1150 = vst [vmem:[%s367 + $0x30] sm:$0xff] %v1142
        %1151 = vst [vmem:[%s367 + $0x38] sm:$0xff] %v1143
        %s1152 = sand.u32 %s249, 1
        %s1153 = scalar_lea.sflag [#allocation4], %s1152
        %s1154 = sand.u32 %s249, 1
        %s1155 = smul.addr %s1154, 64
        %s1156 = scalar_lea.vmem [#allocation6], %s1155
        // Predicated region
        $region65: #{tpu_custom_call.1} parent=59 // pred_check
          %p1157 = pneg %p259
        $region66: #{tpu_custom_call.1} parent=59 // pred_check_branch
          %1159 = sbr.rel (%p1157) target = $region68
        $region67: #{tpu_custom_call.1} parent=59 // pred_region
          %s1161 = ssub.s32 1024, 1024
          %1162 = vsyncadd %s1153, %s1161
          %s1163 = smul.addr %s26, 8
          %s1164 = smul.addr %s1163, 128
          %s1165 = scalar_lea.hbm %s10, %s1164
          %s1166 = sshll.u32 %s1156, 4
          %s1167 = int_to_ptr.vmem [resolvable:$true] %s1166
          %1172 = dma.vmem_to_hbm [thread:$0]  %s1167, 1024, %s1165, %s1153, 256, 256, 16
        $region68: #{tpu_custom_call.1} parent=59 // pred_fallthru
          _
      $region60: #{tpu_custom_call.1} parent=5 // pred_fallthru
        _
      %p1173 = scmp.le.s32.totalorder 2, %s21
      // Predicated region
      $region69: #{tpu_custom_call.1} parent=5 // pred_check
        %p1174 = pneg %p1173
      $region70: #{tpu_custom_call.1} parent=5 // pred_check_branch
        %1176 = sbr.rel (%p1174) target = $region72
      $region71: #{tpu_custom_call.1} parent=5 // pred_region
        %s1177 = ssub.s32 %s21, 2
        // Predicated region
        $region73: #{tpu_custom_call.1} parent=71 // pred_check
          %p1178 = pneg %p265
        $region74: #{tpu_custom_call.1} parent=71 // pred_check_branch
          %1180 = sbr.rel (%p1178) target = $region76
        $region75: #{tpu_custom_call.1} parent=71 // pred_region
          %s1181 = sand.u32 %s250, 1
          %s1182 = scalar_lea.sflag [#allocation4], %s1181
          %s1183 = sand.u32 %s250, 1
          %s1184 = smul.addr %s1183, 64
          %s1185 = scalar_lea.vmem [#allocation6], %s1184
          %1186 = dma.done %s1182, 1024
        $region76: #{tpu_custom_call.1} parent=71 // pred_fallthru
          _
      $region72: #{tpu_custom_call.1} parent=5 // pred_fallthru
        _
    $region6: #{tpu_custom_call.1} parent=1 // loop_footer
      %s25 = sadd.s32 1, %s21
    $region7: #{tpu_custom_call.1} parent=1 // loop_footer_branch
      %20 = sbr.rel target = $region3
    $region8: #{tpu_custom_call.1} parent=1 // loop_exit
      _
    %1187 = vsyncpa [#allocation4], 1
    %s1188 = scalar_lea.sflag [#allocation4], 1
    %1189 = vsyncpa %s1188, 1
    %1190 = vsyncpa [#allocation5], 1
    %s1191 = scalar_lea.sflag [#allocation5], 1
    %1192 = vsyncpa %s1191, 1

</llo_original>
